<compile_context>
chip_gen: v7x
topology: tpu7x:2x2x1
jax: 0.10.0
libtpu: 0.0.40
codegen_flags: <defaults>
</compile_context>

<pallas_src>
import jax
import jax.numpy as jnp
from jax.experimental import pallas as pl
from jax.experimental.pallas import tpu as pltpu


def _cdiv(a, b):
    return -(-a // b)


# ----------------------------- kernels ------------------------------------ #

def _conv3x3_s2_kernel(xe_ref, xo_ref, w_ref, b_ref, o_ref):
    """3x3 / stride-2 / pad-1 conv for one (row-band, Cout-tile) output tile.

    xe_ref/xo_ref: (1, TH+1, 2, Wo+1, C)  even/odd padded-input columns, rows
                                          already split into (row//2, row%2).
    w_ref:         (9, C, TN)             tap-major weights (bf16).
    b_ref:         (1, TN)                bias (f32).
    o_ref:         (TH*Wo, TN)            lane-dense output tile.
    """
    _, thp1, _, wop1, cin = xe_ref.shape
    th, wo = thp1 - 1, wop1 - 1
    acc = jnp.zeros(o_ref.shape, jnp.float32)
    for ky in range(3):
        q0, p = ky // 2, ky % 2            # padded row 2*t+ky == 2*(t+q0)+p
        for kx in range(3):
            u0 = kx // 2                   # padded col 2*w+kx == 2*(w+u0)+(kx%2)
            src = xe_ref if kx % 2 == 0 else xo_ref
            tap = src[0, pl.ds(q0, th), p, pl.ds(u0, wo), :]   # (TH, Wo, C) bf16
            acc = acc + jnp.dot(tap.reshape(th * wo, cin),
                                w_ref[3 * ky + kx],
                                preferred_element_type=jnp.float32)
    o_ref[...] = (acc + b_ref[...]).astype(o_ref.dtype)


def _avgpool2x2_kernel(x_ref, o_ref):
    """2x2 / stride-2 average pool on a tile of output rows.

    x_ref: (TR, 2, Wo, 2, C)  -- axes 1/3 are the intra-window row/col parity.
    o_ref: (TR, Wo, C)
    """
    s = (x_ref[:, 0, :, 0, :].astype(jnp.float32)
         + x_ref[:, 0, :, 1, :].astype(jnp.float32)
         + x_ref[:, 1, :, 0, :].astype(jnp.float32)
         + x_ref[:, 1, :, 1, :].astype(jnp.float32))
    o_ref[...] = (s * 0.25).astype(o_ref.dtype)


# ----------------------------- wrappers ------------------------------------ #

def downsample_conv_nhwc(x_nhwc, weight, bias=None, *, row_tile_target=512):
    """Conv2d(C, Cout, 3, stride=2, padding=1) forward, NHWC in / NHWC out."""
    N, H, W, C = x_nhwc.shape
    assert H % 2 == 0 and W % 2 == 0, "even spatial sizes only"
    # TODO(synk): odd H/W (PyTorch still pads+floors) needs masked edge tiles.
    Cout, Cin, KH, KW = weight.shape
    assert (Cin, KH, KW) == (C, 3, 3)
    Ho, Wo = H // 2, W // 2

    if bias is None:
        bias = jnp.zeros((Cout,), jnp.float32)

    # ---- tiling: row bands of TH output rows (TH | Ho); M = TH*Wo per tile --
    TH = 1
    for d in range(1, Ho + 1):
        if Ho % d == 0 and d * Wo <= row_tile_target:
            TH = d
    NB = Ho // TH
    # Lane-dense output: pad Cout to a multiple of 128; TN = 128 or 256.
    Cout_pad = _cdiv(Cout, 128) * 128
    TN = 256 if Cout_pad % 256 == 0 else 128

    # ---- input prep (layout glue only; no 9x im2col materialization) -------
    xp = jnp.pad(x_nhwc, ((0, 0), (1, 1), (1, 1), (0, 0))).astype(jnp.bfloat16)
    if NB == 1:
        xb = xp.reshape(N, 2 * TH + 2, W + 2, C)
    else:
        xb = jnp.concatenate(
            [xp[:, 2 * b * TH: 2 * b * TH + 2 * TH + 2][:, None]
             for b in range(NB)], axis=1)
        xb = xb.reshape(N * NB, 2 * TH + 2, W + 2, C)
    # Row parity split is a free reshape; column parity split is one ~1x slice
    # (vs. the 9x cols array this replaces).
    xb = xb.reshape(N * NB, TH + 1, 2, Wo + 1, 2, C)
    xe = xb[:, :, :, :, 0, :]                     # (N*NB, TH+1, 2, Wo+1, C)
    xo = xb[:, :, :, :, 1, :]

    # torch (Cout, Cin, kh, kw) -> tap-major (9, Cin, Cout_pad), bf16 for MXU.
    w_mat = jnp.transpose(weight, (2, 3, 1, 0)).reshape(9, C, Cout)
    w_mat = jnp.pad(w_mat, ((0, 0), (0, 0), (0, Cout_pad - Cout))).astype(jnp.bfloat16)
    b_row = jnp.pad(bias.astype(jnp.float32), (0, Cout_pad - Cout)).reshape(1, Cout_pad)

    grid = (N * NB, Cout_pad // TN)
    out_flat = pl.pallas_call(
        _conv3x3_s2_kernel,
        out_shape=jax.ShapeDtypeStruct((N * Ho * Wo, Cout_pad), x_nhwc.dtype),
        grid=grid,
        in_specs=[
            pl.BlockSpec((1, TH + 1, 2, Wo + 1, C), lambda i, j: (i, 0, 0, 0, 0)),
            pl.BlockSpec((1, TH + 1, 2, Wo + 1, C), lambda i, j: (i, 0, 0, 0, 0)),
            pl.BlockSpec((9, C, TN), lambda i, j: (0, 0, j)),
            pl.BlockSpec((1, TN), lambda i, j: (0, j)),
        ],
        out_specs=pl.BlockSpec((TH * Wo, TN), lambda i, j: (i, j)),
        compiler_params=pltpu.CompilerParams(
            dimension_semantics=("parallel", "parallel"),
            vmem_limit_bytes=64 * 1024 * 1024,
        ),
    )(xe, xo, w_mat, b_row)

    return out_flat[:, :Cout].reshape(N, Ho, Wo, Cout)


def downsample_avgpool_nhwc(x_nhwc, *, row_tile=128):
    """AvgPool2d(kernel=2, stride=2) forward, NHWC in / NHWC out."""
    N, H, W, C = x_nhwc.shape
    assert H % 2 == 0 and W % 2 == 0, "even spatial sizes only"
    # TODO(synk): odd H/W -> PyTorch AvgPool2d(2) floors; handle by cropping.
    Ho, Wo = H // 2, W // 2
    rows = N * Ho

    TR = min(rows, row_tile)
    if _cdiv(rows, TR) < 2 and rows >= 2:      # give megacore >= 2 parallel steps
        TR = _cdiv(rows, 2)
    grid = (_cdiv(rows, TR),)

    xr = x_nhwc.reshape(rows, 2, Wo, 2, C)     # free row-major reshape, no transpose

    out = pl.pallas_call(
        _avgpool2x2_kernel,
        out_shape=jax.ShapeDtypeStruct((rows, Wo, C), x_nhwc.dtype),
        grid=grid,
        in_specs=[pl.BlockSpec((TR, 2, Wo, 2, C), lambda i: (i, 0, 0, 0, 0))],
        out_specs=pl.BlockSpec((TR, Wo, C), lambda i: (i, 0, 0)),
        compiler_params=pltpu.CompilerParams(
            dimension_semantics=("parallel",),
            vmem_limit_bytes=64 * 1024 * 1024,
        ),
    )(xr)
    return out.reshape(N, Ho, Wo, C)


def downsample(x_nchw, use_conv, weight=None, bias=None):
    """PyTorch-layout (NCHW) entry point matching Downsample.forward.

    For NHWC end-to-end models call downsample_conv_nhwc / downsample_avgpool_nhwc
    directly and skip both transposes.
    """
    x_nhwc = jnp.transpose(x_nchw, (0, 2, 3, 1))
    if use_conv:
        y = downsample_conv_nhwc(x_nhwc, weight, bias)
    else:
        y = downsample_avgpool_nhwc(x_nhwc)
    return jnp.transpose(y, (0, 3, 1, 2))


# ------------------------------- main -------------------------------------- #

if __name__ == "__main__":
    key = jax.random.PRNGKey(0)
    kx, kw, kb = jax.random.split(key, 3)

    N, C, H, W = 2, 4, 16, 16
    x = jax.random.normal(kx, (N, C, H, W), dtype=jnp.float32)

    # Deterministic synthetic Conv2d(C, C, 3) parameters (PyTorch OIHW layout).
    weight = 0.1 * jax.random.normal(kw, (C, C, 3, 3), dtype=jnp.float32)
    bias = 0.1 * jax.random.normal(kb, (C,), dtype=jnp.float32)

    downsample_j = jax.jit(downsample, static_argnames=("use_conv",))

    # ---- use_conv=True path ----
    y_conv = jax.block_until_ready(downsample_j(x, use_conv=True, weight=weight, bias=bias))
    assert y_conv.shape == (N, C, H // 2, W // 2)
    # Reference with the same bf16 matmul operands + f32 accumulation.
    ref_bf16 = jax.lax.conv_general_dilated(
        x.astype(jnp.bfloat16), weight.astype(jnp.bfloat16),
        window_strides=(2, 2), padding=((1, 1), (1, 1)),
        dimension_numbers=("NCHW", "OIHW", "NCHW"),
        preferred_element_type=jnp.float32,
    ) + bias.reshape(1, -1, 1, 1)
    assert jnp.allclose(y_conv, ref_bf16, atol=2e-3, rtol=2e-3)
    # Loose sanity check against the pure-f32 convolution.
    ref_f32 = jax.lax.conv_general_dilated(
        x, weight, window_strides=(2, 2), padding=((1, 1), (1, 1)),
        dimension_numbers=("NCHW", "OIHW", "NCHW"),
    ) + bias.reshape(1, -1, 1, 1)
    assert jnp.allclose(y_conv, ref_f32, atol=5e-2, rtol=5e-2)

    # ---- use_conv=False path ----
    y_pool = jax.block_until_ready(downsample_j(x, use_conv=False))
    assert y_pool.shape == (N, C, H // 2, W // 2)
    ref_pool = x.reshape(N, C, H // 2, 2, W // 2, 2).mean(axis=(3, 5))
    assert jnp.allclose(y_pool, ref_pool, atol=1e-5, rtol=1e-5)

    print("KERNEL_OK")
</pallas_src>

<mosaic_0001>
module attributes {stable_mosaic.version = 11 : i64} {
  func.func @_conv3x3_s2_kernel(%arg0: i32, %arg1: i32, %arg2: memref<1x9x2x9x4xbf16, #tpu.memory_space<vmem>>, %arg3: memref<1x9x2x9x4xbf16, #tpu.memory_space<vmem>>, %arg4: memref<9x4x128xbf16, #tpu.memory_space<vmem>>, %arg5: memref<1x128xf32, #tpu.memory_space<vmem>>, %arg6: memref<64x128xf32, #tpu.memory_space<vmem>>) attributes {dimension_semantics = [#tpu.dimension_semantics<parallel>, #tpu.dimension_semantics<parallel>], iteration_bounds = array<i64: 2, 1>, scalar_prefetch = 0 : i64, scratch_operands = 0 : i64, tpu.core_type = #tpu.core_type<tc>, window_params = [{transform_indices = @transform_0, window_bounds = array<i64: 1, 9, 2, 9, 4>}, {transform_indices = @transform_1, window_bounds = array<i64: 1, 9, 2, 9, 4>}, {transform_indices = @transform_2, window_bounds = array<i64: 9, 4, 128>}, {transform_indices = @transform_3, window_bounds = array<i64: 1, 128>}, {transform_indices = @transform_4, window_bounds = array<i64: 64, 128>}]} {
    %cst = arith.constant 0.000000e+00 : f32
    %0 = vector.broadcast %cst : f32 to vector<64x128xf32>
    %c0 = arith.constant 0 : index
    %c0_0 = arith.constant 0 : index
    %c0_1 = arith.constant 0 : index
    %c0_2 = arith.constant 0 : index
    %c0_3 = arith.constant 0 : index
    %1 = vector.load %arg2[%c0, %c0_0, %c0_1, %c0_2, %c0_3] : memref<1x9x2x9x4xbf16, #tpu.memory_space<vmem>>, vector<1x8x1x8x4xbf16>
    %2 = vector.shape_cast %1 : vector<1x8x1x8x4xbf16> to vector<8x8x4xbf16>
    %3 = vector.shape_cast %2 : vector<8x8x4xbf16> to vector<64x4xbf16>
    %c0_4 = arith.constant 0 : index
    %c0_5 = arith.constant 0 : index
    %c0_6 = arith.constant 0 : index
    %4 = vector.load %arg4[%c0_4, %c0_5, %c0_6] : memref<9x4x128xbf16, #tpu.memory_space<vmem>>, vector<1x4x128xbf16>
    %5 = vector.shape_cast %4 : vector<1x4x128xbf16> to vector<4x128xbf16>
    %cst_7 = arith.constant dense<0.000000e+00> : vector<64x128xf32>
    %6 = tpu.matmul %3, %5, %cst_7 {dimension_numbers = #tpu.dot_dimension_numbers<[1], [0], [0], [1], [0, 0, 1, 1], [], []>} : vector<64x4xbf16>, vector<4x128xbf16>, vector<64x128xf32> -> vector<64x128xf32>
    %7 = arith.addf %0, %6 : vector<64x128xf32>
    %c0_8 = arith.constant 0 : index
    %c0_9 = arith.constant 0 : index
    %c0_10 = arith.constant 0 : index
    %c0_11 = arith.constant 0 : index
    %c0_12 = arith.constant 0 : index
    %8 = vector.load %arg3[%c0_8, %c0_9, %c0_10, %c0_11, %c0_12] : memref<1x9x2x9x4xbf16, #tpu.memory_space<vmem>>, vector<1x8x1x8x4xbf16>
    %9 = vector.shape_cast %8 : vector<1x8x1x8x4xbf16> to vector<8x8x4xbf16>
    %10 = vector.shape_cast %9 : vector<8x8x4xbf16> to vector<64x4xbf16>
    %c1 = arith.constant 1 : index
    %c0_13 = arith.constant 0 : index
    %c0_14 = arith.constant 0 : index
    %11 = vector.load %arg4[%c1, %c0_13, %c0_14] : memref<9x4x128xbf16, #tpu.memory_space<vmem>>, vector<1x4x128xbf16>
    %12 = vector.shape_cast %11 : vector<1x4x128xbf16> to vector<4x128xbf16>
    %cst_15 = arith.constant dense<0.000000e+00> : vector<64x128xf32>
    %13 = tpu.matmul %10, %12, %cst_15 {dimension_numbers = #tpu.dot_dimension_numbers<[1], [0], [0], [1], [0, 0, 1, 1], [], []>} : vector<64x4xbf16>, vector<4x128xbf16>, vector<64x128xf32> -> vector<64x128xf32>
    %14 = arith.addf %7, %13 : vector<64x128xf32>
    %c0_16 = arith.constant 0 : index
    %c0_17 = arith.constant 0 : index
    %c0_18 = arith.constant 0 : index
    %c1_19 = arith.constant 1 : index
    %c0_20 = arith.constant 0 : index
    %15 = vector.load %arg2[%c0_16, %c0_17, %c0_18, %c1_19, %c0_20] : memref<1x9x2x9x4xbf16, #tpu.memory_space<vmem>>, vector<1x8x1x8x4xbf16>
    %16 = vector.shape_cast %15 : vector<1x8x1x8x4xbf16> to vector<8x8x4xbf16>
    %17 = vector.shape_cast %16 : vector<8x8x4xbf16> to vector<64x4xbf16>
    %c2 = arith.constant 2 : index
    %c0_21 = arith.constant 0 : index
    %c0_22 = arith.constant 0 : index
    %18 = vector.load %arg4[%c2, %c0_21, %c0_22] : memref<9x4x128xbf16, #tpu.memory_space<vmem>>, vector<1x4x128xbf16>
    %19 = vector.shape_cast %18 : vector<1x4x128xbf16> to vector<4x128xbf16>
    %cst_23 = arith.constant dense<0.000000e+00> : vector<64x128xf32>
    %20 = tpu.matmul %17, %19, %cst_23 {dimension_numbers = #tpu.dot_dimension_numbers<[1], [0], [0], [1], [0, 0, 1, 1], [], []>} : vector<64x4xbf16>, vector<4x128xbf16>, vector<64x128xf32> -> vector<64x128xf32>
    %21 = arith.addf %14, %20 : vector<64x128xf32>
    %c0_24 = arith.constant 0 : index
    %c0_25 = arith.constant 0 : index
    %c1_26 = arith.constant 1 : index
    %c0_27 = arith.constant 0 : index
    %c0_28 = arith.constant 0 : index
    %22 = vector.load %arg2[%c0_24, %c0_25, %c1_26, %c0_27, %c0_28] : memref<1x9x2x9x4xbf16, #tpu.memory_space<vmem>>, vector<1x8x1x8x4xbf16>
    %23 = vector.shape_cast %22 : vector<1x8x1x8x4xbf16> to vector<8x8x4xbf16>
    %24 = vector.shape_cast %23 : vector<8x8x4xbf16> to vector<64x4xbf16>
    %c3 = arith.constant 3 : index
    %c0_29 = arith.constant 0 : index
    %c0_30 = arith.constant 0 : index
    %25 = vector.load %arg4[%c3, %c0_29, %c0_30] : memref<9x4x128xbf16, #tpu.memory_space<vmem>>, vector<1x4x128xbf16>
    %26 = vector.shape_cast %25 : vector<1x4x128xbf16> to vector<4x128xbf16>
    %cst_31 = arith.constant dense<0.000000e+00> : vector<64x128xf32>
    %27 = tpu.matmul %24, %26, %cst_31 {dimension_numbers = #tpu.dot_dimension_numbers<[1], [0], [0], [1], [0, 0, 1, 1], [], []>} : vector<64x4xbf16>, vector<4x128xbf16>, vector<64x128xf32> -> vector<64x128xf32>
    %28 = arith.addf %21, %27 : vector<64x128xf32>
    %c0_32 = arith.constant 0 : index
    %c0_33 = arith.constant 0 : index
    %c1_34 = arith.constant 1 : index
    %c0_35 = arith.constant 0 : index
    %c0_36 = arith.constant 0 : index
    %29 = vector.load %arg3[%c0_32, %c0_33, %c1_34, %c0_35, %c0_36] : memref<1x9x2x9x4xbf16, #tpu.memory_space<vmem>>, vector<1x8x1x8x4xbf16>
    %30 = vector.shape_cast %29 : vector<1x8x1x8x4xbf16> to vector<8x8x4xbf16>
    %31 = vector.shape_cast %30 : vector<8x8x4xbf16> to vector<64x4xbf16>
    %c4 = arith.constant 4 : index
    %c0_37 = arith.constant 0 : index
    %c0_38 = arith.constant 0 : index
    %32 = vector.load %arg4[%c4, %c0_37, %c0_38] : memref<9x4x128xbf16, #tpu.memory_space<vmem>>, vector<1x4x128xbf16>
    %33 = vector.shape_cast %32 : vector<1x4x128xbf16> to vector<4x128xbf16>
    %cst_39 = arith.constant dense<0.000000e+00> : vector<64x128xf32>
    %34 = tpu.matmul %31, %33, %cst_39 {dimension_numbers = #tpu.dot_dimension_numbers<[1], [0], [0], [1], [0, 0, 1, 1], [], []>} : vector<64x4xbf16>, vector<4x128xbf16>, vector<64x128xf32> -> vector<64x128xf32>
    %35 = arith.addf %28, %34 : vector<64x128xf32>
    %c0_40 = arith.constant 0 : index
    %c0_41 = arith.constant 0 : index
    %c1_42 = arith.constant 1 : index
    %c1_43 = arith.constant 1 : index
    %c0_44 = arith.constant 0 : index
    %36 = vector.load %arg2[%c0_40, %c0_41, %c1_42, %c1_43, %c0_44] : memref<1x9x2x9x4xbf16, #tpu.memory_space<vmem>>, vector<1x8x1x8x4xbf16>
    %37 = vector.shape_cast %36 : vector<1x8x1x8x4xbf16> to vector<8x8x4xbf16>
    %38 = vector.shape_cast %37 : vector<8x8x4xbf16> to vector<64x4xbf16>
    %c5 = arith.constant 5 : index
    %c0_45 = arith.constant 0 : index
    %c0_46 = arith.constant 0 : index
    %39 = vector.load %arg4[%c5, %c0_45, %c0_46] : memref<9x4x128xbf16, #tpu.memory_space<vmem>>, vector<1x4x128xbf16>
    %40 = vector.shape_cast %39 : vector<1x4x128xbf16> to vector<4x128xbf16>
    %cst_47 = arith.constant dense<0.000000e+00> : vector<64x128xf32>
    %41 = tpu.matmul %38, %40, %cst_47 {dimension_numbers = #tpu.dot_dimension_numbers<[1], [0], [0], [1], [0, 0, 1, 1], [], []>} : vector<64x4xbf16>, vector<4x128xbf16>, vector<64x128xf32> -> vector<64x128xf32>
    %42 = arith.addf %35, %41 : vector<64x128xf32>
    %c0_48 = arith.constant 0 : index
    %c1_49 = arith.constant 1 : index
    %c0_50 = arith.constant 0 : index
    %c0_51 = arith.constant 0 : index
    %c0_52 = arith.constant 0 : index
    %43 = vector.load %arg2[%c0_48, %c1_49, %c0_50, %c0_51, %c0_52] : memref<1x9x2x9x4xbf16, #tpu.memory_space<vmem>>, vector<1x8x1x8x4xbf16>
    %44 = vector.shape_cast %43 : vector<1x8x1x8x4xbf16> to vector<8x8x4xbf16>
    %45 = vector.shape_cast %44 : vector<8x8x4xbf16> to vector<64x4xbf16>
    %c6 = arith.constant 6 : index
    %c0_53 = arith.constant 0 : index
    %c0_54 = arith.constant 0 : index
    %46 = vector.load %arg4[%c6, %c0_53, %c0_54] : memref<9x4x128xbf16, #tpu.memory_space<vmem>>, vector<1x4x128xbf16>
    %47 = vector.shape_cast %46 : vector<1x4x128xbf16> to vector<4x128xbf16>
    %cst_55 = arith.constant dense<0.000000e+00> : vector<64x128xf32>
    %48 = tpu.matmul %45, %47, %cst_55 {dimension_numbers = #tpu.dot_dimension_numbers<[1], [0], [0], [1], [0, 0, 1, 1], [], []>} : vector<64x4xbf16>, vector<4x128xbf16>, vector<64x128xf32> -> vector<64x128xf32>
    %49 = arith.addf %42, %48 : vector<64x128xf32>
    %c0_56 = arith.constant 0 : index
    %c1_57 = arith.constant 1 : index
    %c0_58 = arith.constant 0 : index
    %c0_59 = arith.constant 0 : index
    %c0_60 = arith.constant 0 : index
    %50 = vector.load %arg3[%c0_56, %c1_57, %c0_58, %c0_59, %c0_60] : memref<1x9x2x9x4xbf16, #tpu.memory_space<vmem>>, vector<1x8x1x8x4xbf16>
    %51 = vector.shape_cast %50 : vector<1x8x1x8x4xbf16> to vector<8x8x4xbf16>
    %52 = vector.shape_cast %51 : vector<8x8x4xbf16> to vector<64x4xbf16>
    %c7 = arith.constant 7 : index
    %c0_61 = arith.constant 0 : index
    %c0_62 = arith.constant 0 : index
    %53 = vector.load %arg4[%c7, %c0_61, %c0_62] : memref<9x4x128xbf16, #tpu.memory_space<vmem>>, vector<1x4x128xbf16>
    %54 = vector.shape_cast %53 : vector<1x4x128xbf16> to vector<4x128xbf16>
    %cst_63 = arith.constant dense<0.000000e+00> : vector<64x128xf32>
    %55 = tpu.matmul %52, %54, %cst_63 {dimension_numbers = #tpu.dot_dimension_numbers<[1], [0], [0], [1], [0, 0, 1, 1], [], []>} : vector<64x4xbf16>, vector<4x128xbf16>, vector<64x128xf32> -> vector<64x128xf32>
    %56 = arith.addf %49, %55 : vector<64x128xf32>
    %c0_64 = arith.constant 0 : index
    %c1_65 = arith.constant 1 : index
    %c0_66 = arith.constant 0 : index
    %c1_67 = arith.constant 1 : index
    %c0_68 = arith.constant 0 : index
    %57 = vector.load %arg2[%c0_64, %c1_65, %c0_66, %c1_67, %c0_68] : memref<1x9x2x9x4xbf16, #tpu.memory_space<vmem>>, vector<1x8x1x8x4xbf16>
    %58 = vector.shape_cast %57 : vector<1x8x1x8x4xbf16> to vector<8x8x4xbf16>
    %59 = vector.shape_cast %58 : vector<8x8x4xbf16> to vector<64x4xbf16>
    %c8 = arith.constant 8 : index
    %c0_69 = arith.constant 0 : index
    %c0_70 = arith.constant 0 : index
    %60 = vector.load %arg4[%c8, %c0_69, %c0_70] : memref<9x4x128xbf16, #tpu.memory_space<vmem>>, vector<1x4x128xbf16>
    %61 = vector.shape_cast %60 : vector<1x4x128xbf16> to vector<4x128xbf16>
    %cst_71 = arith.constant dense<0.000000e+00> : vector<64x128xf32>
    %62 = tpu.matmul %59, %61, %cst_71 {dimension_numbers = #tpu.dot_dimension_numbers<[1], [0], [0], [1], [0, 0, 1, 1], [], []>} : vector<64x4xbf16>, vector<4x128xbf16>, vector<64x128xf32> -> vector<64x128xf32>
    %63 = arith.addf %56, %62 : vector<64x128xf32>
    %c0_72 = arith.constant 0 : index
    %c0_73 = arith.constant 0 : index
    %64 = vector.load %arg5[%c0_72, %c0_73] : memref<1x128xf32, #tpu.memory_space<vmem>>, vector<1x128xf32>
    %65 = vector.broadcast %64 : vector<1x128xf32> to vector<64x128xf32>
    %66 = arith.addf %63, %65 : vector<64x128xf32>
    %c0_74 = arith.constant 0 : index
    %c0_75 = arith.constant 0 : index
    %67 = vector.load %arg6[%c0_74, %c0_75] : memref<64x128xf32, #tpu.memory_space<vmem>>, vector<64x128xf32>
    tpu.vector_store %arg6[%c0_74, %c0_75], %66 {strides = array<i32>} : memref<64x128xf32, #tpu.memory_space<vmem>>, vector<64x128xf32>,
    return
  }
  func.func @transform_0(%arg0: i32, %arg1: i32) -> (i32, i32, i32, i32, i32) {
    %c0_i32 = arith.constant 0 : i32
    %c0_i32_0 = arith.constant 0 : i32
    %c0_i32_1 = arith.constant 0 : i32
    %c0_i32_2 = arith.constant 0 : i32
    %c0_i32_3 = arith.constant 0 : i32
    return %arg0, %c0_i32, %c0_i32_0, %c0_i32_1, %c0_i32_2 : i32, i32, i32, i32, i32
  }
  func.func @transform_1(%arg0: i32, %arg1: i32) -> (i32, i32, i32, i32, i32) {
    %c0_i32 = arith.constant 0 : i32
    %c0_i32_0 = arith.constant 0 : i32
    %c0_i32_1 = arith.constant 0 : i32
    %c0_i32_2 = arith.constant 0 : i32
    %c0_i32_3 = arith.constant 0 : i32
    return %arg0, %c0_i32, %c0_i32_0, %c0_i32_1, %c0_i32_2 : i32, i32, i32, i32, i32
  }
  func.func @transform_2(%arg0: i32, %arg1: i32) -> (i32, i32, i32) {
    %c0_i32 = arith.constant 0 : i32
    %c0_i32_0 = arith.constant 0 : i32
    %c0_i32_1 = arith.constant 0 : i32
    return %c0_i32, %c0_i32_0, %arg1 : i32, i32, i32
  }
  func.func @transform_3(%arg0: i32, %arg1: i32) -> (i32, i32) {
    %c0_i32 = arith.constant 0 : i32
    %c0_i32_0 = arith.constant 0 : i32
    return %c0_i32, %arg1 : i32, i32
  }
  func.func @transform_4(%arg0: i32, %arg1: i32) -> (i32, i32) {
    %c0_i32 = arith.constant 0 : i32
    return %arg0, %arg1 : i32, i32
  }
}

</mosaic_0001>

<llo_original>
// kernel: downsample.1
$region0: #{downsample.1}
  #allocation0 [shape = 'u32[]', space=smem, size = 0x4, offset = 0x4, fixed_abs, tag = 'smem constant byte address 0x4 - core index']
  #allocation1 [shape = 'u32[144,128]{1,0:T(1,128)}', space=vmem, size = 0x12000, scoped, tag = 'internal scratch']
  %s0 = inlined_call_operand.hbm [shape: bf16[2,9,2,9,4], index: 0, kind: input, shape index: {}]
  %s1 = inlined_call_operand.hbm [shape: bf16[2,9,2,9,4], index: 1, kind: input, shape index: {}]
  %s2 = inlined_call_operand.hbm [shape: bf16[9,4,128], index: 2, kind: input, shape index: {}]
  %s3 = inlined_call_operand.hbm [shape: f32[1,128], index: 3, kind: input, shape index: {}]
  %s4 = inlined_call_operand.hbm [shape: f32[128,128], index: 4, kind: output, shape index: {}]
  %s5 = sld [smem:[#allocation0]]
  $region65: #{downsample.1} parent=0
    _
  %s7 = ssub.s32 1, %s5
  %s8 = scalar_select 0, %s7, %s5
  $region1: #{downsample.1} parent=0
    #allocation2 [shape = 'u8[147456]{0}', space=vmem, size = 0x24000, scoped, tag = 'input window, operand 0']
    #allocation3 [shape = 's32[2]{0}', space=sflag, size = 0x8, scoped, tag = 'scoped memory for downsample.1']
    #allocation4 [shape = 's32[2]{0}', space=sflag, size = 0x8, scoped, tag = 'scoped memory for downsample.1']
    #allocation5 [shape = 'u8[147456]{0}', space=vmem, size = 0x24000, scoped, tag = 'input window, operand 1']
    #allocation6 [shape = 's32[2]{0}', space=sflag, size = 0x8, scoped, tag = 'scoped memory for downsample.1']
    #allocation7 [shape = 'u8[9216]{0}', space=vmem, size = 0x2400, scoped, tag = 'input window, operand 2, single buffered']
    #allocation8 [shape = 'u8[512]{0}', space=vmem, size = 0x400, scoped, tag = 'input window, operand 3, single buffered']
    #allocation9 [shape = 's32[1]{0}', space=sflag, size = 0x4, scoped, tag = 'scoped memory for downsample.1']
    #allocation10 [shape = 'u8[65536]{0}', space=vmem, size = 0x10000, scoped, tag = 'output window, operand 0']
    %9 = vsyncpa [#allocation3], 0
    %s10 = scalar_lea.sflag [#allocation3], 1
    %11 = vsyncpa %s10, 0
    %12 = vsyncpa [#allocation6], 0
    %s13 = scalar_lea.sflag [#allocation6], 1
    %14 = vsyncpa %s13, 0
    %15 = vsyncpa [#allocation9], 0
    %16 = vsyncpa [#allocation4], 0
    %s17 = scalar_lea.sflag [#allocation4], 1
    %18 = vsyncpa %s17, 0
    loop: start=0, step=1, limit=4
    $region2: #{downsample.1} parent=1 // loop_pre_header
      _
    $region3: #{downsample.1} parent=1 // loop_header
      %s20 = sphi 0, %s24
      %p21 = scmp.ge.s32.totalorder %s20, 4
      %s27 = sphi 0, %s39
      %s28 = sphi 0, %s35
      %s29 = sphi 0, %s27
      %s30 = sphi 0, %s28
      %s31 = sphi 0, %s29
      %s32 = sphi 0, %s30
      %s42 = sphi 0, %s44
      %s45 = sphi 0, %s42
      %s46 = sphi 0, %s45
      %s62 = sphi 0, %s46
      %s68 = sphi 0, %s70
      %s71 = sphi 0, %s68
      %s72 = sphi 0, %s71
      %s88 = sphi 0, %s72
      %s94 = sphi 0, %s96
      %s97 = sphi 0, %s94
      %s98 = sphi 0, %s97
      %s114 = sphi 0, %s98
      %s120 = sphi 0, %s122
      %s123 = sphi 0, %s120
      %s124 = sphi 0, %s123
      %s140 = sphi 0, %s124
      %s148 = sphi 0, %s150
      %s151 = sphi 0, %s148
      %s152 = sphi 0, %s151
      %s168 = sphi 0, %s152
    $region4: #{downsample.1} parent=1 // loop_header_branch
      %23 = sbr.rel (%p21) target = $region8
    $region5: #{downsample.1} parent=1 // loop_body
      %s25 = ssub.s32 %s20, 1
      %s26 = ssub.s32 %s20, 2
      %s33 = sadd.s32 1, %s28
      %p34 = scmp.ge.s32.totalorder %s33, 1
      %s35 = scalar_select %p34, 0, %s33
      %s36 = sadd.s32 1, %s27
      %s37 = scalar_select %p34, %s36, %s27
      %p38 = scmp.ge.s32.totalorder %s37, 2
      %s39 = scalar_select %p38, 0, %s37
      %s40 = ssub.s32 %s27, %s39
      %p41 = scmp.eq.s32.totalorder %s40, 0
      %s43 = sadd.s32 %s42, 1
      %s44 = scalar_select %p41, %s42, %s43
      %p47 = pneg %p41
      %p48 = scmp.eq.s32.totalorder %s20, 1
      %p49 = por %p47, %p48
      %p50 = scmp.ne.s32.totalorder %s42, %s45
      %p51 = scmp.eq.s32.totalorder %s20, 0
      %p52 = por %p50, %p51
      %p53 = scmp.ne.s32.totalorder %s42, %s45
      %p54 = scmp.eq.s32.totalorder %s25, 1
      %p55 = por %p53, %p54
      %p56 = scmp.ne.s32.totalorder %s45, %s46
      %p57 = scmp.eq.s32.totalorder %s25, 0
      %p58 = por %p56, %p57
      %p59 = scmp.ne.s32.totalorder %s45, %s46
      %p60 = scmp.eq.s32.totalorder %s26, 1
      %p61 = por %p59, %p60
      %p63 = scmp.ne.s32.totalorder %s46, %s62
      %p64 = scmp.eq.s32.totalorder %s26, 0
      %p65 = por %p63, %p64
      %s66 = ssub.s32 %s27, %s39
      %p67 = scmp.eq.s32.totalorder %s66, 0
      %s69 = sadd.s32 %s68, 1
      %s70 = scalar_select %p67, %s68, %s69
      %p73 = pneg %p67
      %p74 = scmp.eq.s32.totalorder %s20, 1
      %p75 = por %p73, %p74
      %p76 = scmp.ne.s32.totalorder %s68, %s71
      %p77 = scmp.eq.s32.totalorder %s20, 0
      %p78 = por %p76, %p77
      %p79 = scmp.ne.s32.totalorder %s68, %s71
      %p80 = scmp.eq.s32.totalorder %s25, 1
      %p81 = por %p79, %p80
      %p82 = scmp.ne.s32.totalorder %s71, %s72
      %p83 = scmp.eq.s32.totalorder %s25, 0
      %p84 = por %p82, %p83
      %p85 = scmp.ne.s32.totalorder %s71, %s72
      %p86 = scmp.eq.s32.totalorder %s26, 1
      %p87 = por %p85, %p86
      %p89 = scmp.ne.s32.totalorder %s72, %s88
      %p90 = scmp.eq.s32.totalorder %s26, 0
      %p91 = por %p89, %p90
      %s92 = ssub.s32 %s28, %s35
      %p93 = scmp.eq.s32.totalorder %s92, 0
      %s95 = sadd.s32 %s94, 1
      %s96 = scalar_select %p93, %s94, %s95
      %p99 = pneg %p93
      %p100 = scmp.eq.s32.totalorder %s20, 1
      %p101 = por %p99, %p100
      %p102 = scmp.ne.s32.totalorder %s94, %s97
      %p103 = scmp.eq.s32.totalorder %s20, 0
      %p104 = por %p102, %p103
      %p105 = scmp.ne.s32.totalorder %s94, %s97
      %p106 = scmp.eq.s32.totalorder %s25, 1
      %p107 = por %p105, %p106
      %p108 = scmp.ne.s32.totalorder %s97, %s98
      %p109 = scmp.eq.s32.totalorder %s25, 0
      %p110 = por %p108, %p109
      %p111 = scmp.ne.s32.totalorder %s97, %s98
      %p112 = scmp.eq.s32.totalorder %s26, 1
      %p113 = por %p111, %p112
      %p115 = scmp.ne.s32.totalorder %s98, %s114
      %p116 = scmp.eq.s32.totalorder %s26, 0
      %p117 = por %p115, %p116
      %s118 = ssub.s32 %s28, %s35
      %p119 = scmp.eq.s32.totalorder %s118, 0
      %s121 = sadd.s32 %s120, 1
      %s122 = scalar_select %p119, %s120, %s121
      %p125 = pneg %p119
      %p126 = scmp.eq.s32.totalorder %s20, 1
      %p127 = por %p125, %p126
      %p128 = scmp.ne.s32.totalorder %s120, %s123
      %p129 = scmp.eq.s32.totalorder %s20, 0
      %p130 = por %p128, %p129
      %p131 = scmp.ne.s32.totalorder %s120, %s123
      %p132 = scmp.eq.s32.totalorder %s25, 1
      %p133 = por %p131, %p132
      %p134 = scmp.ne.s32.totalorder %s123, %s124
      %p135 = scmp.eq.s32.totalorder %s25, 0
      %p136 = por %p134, %p135
      %p137 = scmp.ne.s32.totalorder %s123, %s124
      %p138 = scmp.eq.s32.totalorder %s26, 1
      %p139 = por %p137, %p138
      %p141 = scmp.ne.s32.totalorder %s124, %s140
      %p142 = scmp.eq.s32.totalorder %s26, 0
      %p143 = por %p141, %p142
      %s144 = ssub.s32 %s27, %s39
      %s145 = ssub.s32 %s28, %s35
      %s146 = sor.u32 %s144, %s145
      %p147 = scmp.eq.s32.totalorder %s146, 0
      %s149 = sadd.s32 %s148, 1
      %s150 = scalar_select %p147, %s148, %s149
      %p153 = pneg %p147
      %p154 = scmp.eq.s32.totalorder %s20, 1
      %p155 = por %p153, %p154
      %p156 = scmp.ne.s32.totalorder %s148, %s151
      %p157 = scmp.eq.s32.totalorder %s20, 0
      %p158 = por %p156, %p157
      %p159 = scmp.ne.s32.totalorder %s148, %s151
      %p160 = scmp.eq.s32.totalorder %s25, 1
      %p161 = por %p159, %p160
      %p162 = scmp.ne.s32.totalorder %s151, %s152
      %p163 = scmp.eq.s32.totalorder %s25, 0
      %p164 = por %p162, %p163
      %p165 = scmp.ne.s32.totalorder %s151, %s152
      %p166 = scmp.eq.s32.totalorder %s26, 1
      %p167 = por %p165, %p166
      %p169 = scmp.ne.s32.totalorder %s152, %s168
      %p170 = scmp.eq.s32.totalorder %s26, 0
      %p171 = por %p169, %p170
      %p172 = scmp.le.s32.totalorder 1, %s20
      %p173 = scmp.lt.s32.totalorder %s20, 3
      %p174 = pnand %p172, %p173
      %p175 = pneg %p174
      // Predicated region
      $region9: #{downsample.1} parent=5 // pred_check
        _
      $region10: #{downsample.1} parent=5 // pred_check_branch
        %177 = sbr.rel (%p174) target = $region12
      $region11: #{downsample.1} parent=5 // pred_region
        %s178 = ssub.s32 %s20, 1
        // Predicated region
        $region13: #{downsample.1} parent=11 // pred_check
          %p179 = pneg %p110
        $region14: #{downsample.1} parent=11 // pred_check_branch
          %181 = sbr.rel (%p179) target = $region16
        $region15: #{downsample.1} parent=11 // pred_region
          %s183 = ssub.s32 288, 288
          %184 = vsyncadd [#allocation6], %s183
          %s185 = smul.addr %s30, 32
          %s186 = scalar_lea.hbm %s2, %s185
          %s187 = sshll.u32 [#allocation7], 4
          %s188 = int_to_ptr.vmem [resolvable:$true] %s187
          %193 = dma.hbm_to_vmem [thread:$0]  %s186, 288, %s188, [#allocation6], 32, 32, 2
        $region16: #{downsample.1} parent=11 // pred_fallthru
          _
        // Predicated region
        $region17: #{downsample.1} parent=11 // pred_check
          %p194 = pneg %p136
        $region18: #{downsample.1} parent=11 // pred_check_branch
          %196 = sbr.rel (%p194) target = $region20
        $region19: #{downsample.1} parent=11 // pred_region
          %s198 = ssub.s32 16, 16
          %199 = vsyncadd [#allocation9], %s198
          %s200 = smul.addr %s30, 16
          %s201 = scalar_lea.hbm %s3, %s200
          %s203 = sshll.u32 [#allocation8], 4
          %s204 = int_to_ptr.vmem [resolvable:$true] %s203
          %206 = dma.hbm_to_vmem [thread:$0]  %s201, 16, %s204, [#allocation9]
        $region20: #{downsample.1} parent=11 // pred_fallthru
          _
      $region12: #{downsample.1} parent=5 // pred_fallthru
        _
      %p207 = scmp.lt.s32.totalorder %s20, 2
      // Predicated region
      $region21: #{downsample.1} parent=5 // pred_check
        %p208 = pneg %p207
      $region22: #{downsample.1} parent=5 // pred_check_branch
        %210 = sbr.rel (%p208) target = $region24
      $region23: #{downsample.1} parent=5 // pred_region
        // Predicated region
        $region25: #{downsample.1} parent=23 // pred_check
          %p211 = pneg %p52
        $region26: #{downsample.1} parent=23 // pred_check_branch
          %213 = sbr.rel (%p211) target = $region28
        $region27: #{downsample.1} parent=23 // pred_region
          %s214 = sand.u32 %s42, 1
          %s215 = scalar_lea.sflag [#allocation3], %s214
          %s216 = sand.u32 %s42, 1
          %s217 = smul.addr %s216, 144
          %s218 = scalar_lea.vmem [#allocation2], %s217
          %s220 = ssub.s32 2304, 2304
          %221 = vsyncadd %s215, %s220
          %s222 = smul.addr %s27, 36
          %s223 = smul.addr %s222, 64
          %s224 = scalar_lea.hbm %s0, %s223
          %s225 = sshll.u32 %s218, 4
          %s226 = int_to_ptr.vmem [resolvable:$true] %s225
          %231 = dma.hbm_to_vmem [thread:$0]  %s224, 2304, %s226, %s215, 64, 64, 4
        $region28: #{downsample.1} parent=23 // pred_fallthru
          _
        // Predicated region
        $region29: #{downsample.1} parent=23 // pred_check
          %p232 = pneg %p78
        $region30: #{downsample.1} parent=23 // pred_check_branch
          %234 = sbr.rel (%p232) target = $region32
        $region31: #{downsample.1} parent=23 // pred_region
          %s235 = sand.u32 %s20, 1
          %s236 = scalar_lea.sflag [#allocation6], %s235
          %s237 = sand.u32 %s68, 1
          %s238 = smul.addr %s237, 144
          %s239 = scalar_lea.vmem [#allocation5], %s238
          %s241 = ssub.s32 2304, 2304
          %242 = vsyncadd %s236, %s241
          %s243 = smul.addr %s27, 36
          %s244 = smul.addr %s243, 64
          %s245 = scalar_lea.hbm %s1, %s244
          %s246 = sshll.u32 %s239, 4
          %s247 = int_to_ptr.vmem [resolvable:$true] %s246
          %252 = dma.hbm_to_vmem [thread:$0]  %s245, 2304, %s247, %s236, 64, 64, 4
        $region32: #{downsample.1} parent=23 // pred_fallthru
          _
      $region24: #{downsample.1} parent=5 // pred_fallthru
        _
      %p253 = scmp.le.s32.totalorder 1, %s20
      %p254 = scmp.lt.s32.totalorder %s20, 3
      %p255 = pnand %p253, %p254
      %p256 = pneg %p255
      // Predicated region
      $region33: #{downsample.1} parent=5 // pred_check
        _
      $region34: #{downsample.1} parent=5 // pred_check_branch
        %258 = sbr.rel (%p255) target = $region36
      $region35: #{downsample.1} parent=5 // pred_region
        %s259 = ssub.s32 %s20, 1
        %s260 = sand.u32 %s45, 1
        %s261 = scalar_lea.sflag [#allocation3], %s260
        %s262 = sand.u32 %s45, 1
        %s263 = smul.addr %s262, 144
        %s264 = scalar_lea.vmem [#allocation2], %s263
        // Predicated region
        $region37: #{downsample.1} parent=35 // pred_check
          %p265 = pneg %p58
        $region38: #{downsample.1} parent=35 // pred_check_branch
          %267 = sbr.rel (%p265) target = $region40
        $region39: #{downsample.1} parent=35 // pred_region
          %268 = dma.done %s261, 2304
        $region40: #{downsample.1} parent=35 // pred_fallthru
          _
        %s269 = sand.u32 %s25, 1
        %s270 = scalar_lea.sflag [#allocation6], %s269
        %s271 = sand.u32 %s71, 1
        %s272 = smul.addr %s271, 144
        %s273 = scalar_lea.vmem [#allocation5], %s272
        // Predicated region
        $region41: #{downsample.1} parent=35 // pred_check
          %p274 = pneg %p84
        $region42: #{downsample.1} parent=35 // pred_check_branch
          %276 = sbr.rel (%p274) target = $region44
        $region43: #{downsample.1} parent=35 // pred_region
          %277 = dma.done %s270, 2304
        $region44: #{downsample.1} parent=35 // pred_fallthru
          _
        // Predicated region
        $region45: #{downsample.1} parent=35 // pred_check
          %p278 = pneg %p110
        $region46: #{downsample.1} parent=35 // pred_check_branch
          %280 = sbr.rel (%p278) target = $region48
        $region47: #{downsample.1} parent=35 // pred_region
          %281 = dma.done [#allocation6], 288
        $region48: #{downsample.1} parent=35 // pred_fallthru
          _
        // Predicated region
        $region49: #{downsample.1} parent=35 // pred_check
          %p282 = pneg %p136
        $region50: #{downsample.1} parent=35 // pred_check_branch
          %284 = sbr.rel (%p282) target = $region52
        $region51: #{downsample.1} parent=35 // pred_region
          %285 = dma.done [#allocation9], 16
        $region52: #{downsample.1} parent=35 // pred_fallthru
          _
        %s286 = sand.u32 %s45, 1
        %s287 = scalar_lea.sflag [#allocation3], %s286
        %s288 = sand.u32 %s45, 1
        %s289 = smul.addr %s288, 144
        %s290 = scalar_lea.vmem [#allocation2], %s289
        %p291 = pneg %p58
        %p292 = pneg %p55
        %s293 = sand.u32 %s25, 1
        %s294 = scalar_lea.sflag [#allocation6], %s293
        %s295 = sand.u32 %s71, 1
        %s296 = smul.addr %s295, 144
        %s297 = scalar_lea.vmem [#allocation5], %s296
        %p298 = pneg %p84
        %p299 = pneg %p81
        %p300 = pneg %p110
        %p301 = pneg %p107
        %p302 = pneg %p136
        %p303 = pneg %p133
        %p304 = pneg %p164
        %p305 = pneg %p161
        %s306 = sand.u32 %s151, 1
        %s307 = scalar_lea.sflag [#allocation4], %s306
        %s308 = sand.u32 %s151, 1
        %s309 = smul.addr %s308, 64
        %s310 = scalar_lea.vmem [#allocation10], %s309
        %s311 = smul.u32 8, %s29
        %v313 = vld [vmem:[%s264] sm:$0xf]
        %v314 = vld [vmem:[%s264 + $0x10] sm:$0xf]
        %v315 = vld [vmem:[%s264 + $0x20] sm:$0xf]
        %v316 = vld [vmem:[%s264 + $0x30] sm:$0xf]
        %v317 = vld [vmem:[%s264 + $0x40] sm:$0xf]
        %v318 = vld [vmem:[%s264 + $0x50] sm:$0xf]
        %v319 = vld [vmem:[%s264 + $0x60] sm:$0xf]
        %v320 = vld [vmem:[%s264 + $0x70] sm:$0xf]
        %v321 = vld [vmem:[#allocation7] sm:$0x3]
        %v322 = vld [vmem:[%s273] sm:$0xf]
        %v323 = vld [vmem:[%s273 + $0x10] sm:$0xf]
        %v324 = vld [vmem:[%s273 + $0x20] sm:$0xf]
        %v325 = vld [vmem:[%s273 + $0x30] sm:$0xf]
        %v326 = vld [vmem:[%s273 + $0x40] sm:$0xf]
        %v327 = vld [vmem:[%s273 + $0x50] sm:$0xf]
        %v328 = vld [vmem:[%s273 + $0x60] sm:$0xf]
        %v329 = vld [vmem:[%s273 + $0x70] sm:$0xf]
        %s330 = scalar_lea.vmem [#allocation7], 2
        %v331 = vld [vmem:[%s330] sm:$0x3]
        %v340 = vunpack.c.l.b16 %v322
        %v341 = vunpack.c.l.b16 %v323
        %v342 = vunpack.c.l.b16 %v324
        %v343 = vunpack.c.l.b16 %v325
        %v344 = vunpack.c.l.b16 %v326
        %v345 = vunpack.c.l.b16 %v327
        %v346 = vunpack.c.l.b16 %v328
        %v347 = vunpack.c.l.b16 %v329
        %v348 = vpack.c.b16 %v341, %v340
        %v349 = vpack.c.b16 %v343, %v342
        %v350 = vpack.c.b16 %v345, %v344
        %v351 = vpack.c.b16 %v347, %v346
        %vm352 = vcmask 31744
        %v354 = vsel %vm352, %v348, 0
        %v357 = vsel %vm352, %v349, 0
        %v360 = vsel %vm352, %v350, 0
        %v363 = vsel %vm352, %v351, 0
        %vm365 = vcmask 1041408
        %v367 = vsel %vm365, %v331, 0
        %369 = vmatprep.subr.bf16.mxu0 0
        %370 = vmatpush1.bf16.msra.mxu0 %v367
        %371 = vmatprep.subr.bf16.mxu0 0
        %372 = vmatpush1.bf16.msra.mxu0 0
        %373 = vmatprep.subr.bf16.mxu0 0
        %374 = vmatpush1.bf16.msra.mxu0 0
        %375 = vmatprep.subr.bf16.mxu0 0
        %376 = vmatpush1.bf16.msra.mxu0 0
        %377 = vmatprep.subr.bf16.mxu0 0
        %378 = vmatpush1.bf16.msra.mxu0 0
        %379 = vmatprep.subr.bf16.mxu0 0
        %380 = vmatpush1.bf16.msra.mxu0 0
        %381 = vmatprep.subr.bf16.mxu0 0
        %382 = vmatpush1.bf16.msra.mxu0 0
        %383 = vmatprep.subr.bf16.mxu0 0
        %384 = vmatpush1.bf16.msra.mxu0 0
        %385 = vmatprep.subr.bf16.mxu0 0
        %386 = vmatpush1.bf16.msra.mxu0 0
        %387 = vmatprep.subr.bf16.mxu0 0
        %388 = vmatpush1.bf16.msra.mxu0 0
        %389 = vmatprep.subr.bf16.mxu0 0
        %390 = vmatpush1.bf16.msra.mxu0 0
        %391 = vmatprep.subr.bf16.mxu0 0
        %392 = vmatpush1.bf16.msra.mxu0 0
        %393 = vmatprep.subr.bf16.mxu0 0
        %394 = vmatpush1.bf16.msra.mxu0 0
        %395 = vmatprep.subr.bf16.mxu0 0
        %396 = vmatpush1.bf16.msra.mxu0 0
        %397 = vmatprep.subr.bf16.mxu0 0
        %398 = vmatpush1.bf16.msra.mxu0 0
        %399 = vmatprep.subr.bf16.mxu0 0
        %400 = vmatpush1.bf16.msra.mxu0 0
        %401 = vmatprep.mubr.bf16.mxu0 0
        %402 = vmatmul.mubr.bf16.gmra.mrb[0].mxu0 %v354
        %v403 = vpop.f32.mrb[0].mxu0
        %v404 = vadd.f32 0.0, %v403
        %v405 = vpop.f32.mrb[0].mxu0
        %v406 = vpop.f32.mrb[0].mxu0
        %v407 = vadd.f32 0.0, %v406
        %v408 = vpop.f32.mrb[0].mxu0
        %409 = vmatprep.mubr.bf16.mxu0 0
        %410 = vmatmul.mubr.bf16.gmra.mrb[0].mxu0 %v357
        %v411 = vpop.f32.mrb[0].mxu0
        %v412 = vadd.f32 0.0, %v411
        %v413 = vpop.f32.mrb[0].mxu0
        %v414 = vpop.f32.mrb[0].mxu0
        %v415 = vadd.f32 0.0, %v414
        %v416 = vpop.f32.mrb[0].mxu0
        %417 = vmatprep.mubr.bf16.mxu0 0
        %418 = vmatmul.mubr.bf16.gmra.mrb[0].mxu0 %v360
        %v419 = vpop.f32.mrb[0].mxu0
        %v420 = vadd.f32 0.0, %v419
        %v421 = vpop.f32.mrb[0].mxu0
        %v422 = vpop.f32.mrb[0].mxu0
        %v423 = vadd.f32 0.0, %v422
        %v424 = vpop.f32.mrb[0].mxu0
        %425 = vmatprep.mubr.bf16.mxu0 0
        %426 = vmatmul.mubr.bf16.gmra.mrb[0].mxu0 %v363
        %v427 = vpop.f32.mrb[0].mxu0
        %v428 = vadd.f32 0.0, %v427
        %v429 = vpop.f32.mrb[0].mxu0
        %v430 = vpop.f32.mrb[0].mxu0
        %v431 = vadd.f32 0.0, %v430
        %v432 = vpop.f32.mrb[0].mxu0
        %433 = vdwg.mxu0
        %v442 = vunpack.c.l.b16 %v313
        %v443 = vunpack.c.l.b16 %v314
        %v444 = vunpack.c.l.b16 %v315
        %v445 = vunpack.c.l.b16 %v316
        %v446 = vunpack.c.l.b16 %v317
        %v447 = vunpack.c.l.b16 %v318
        %v448 = vunpack.c.l.b16 %v319
        %v449 = vunpack.c.l.b16 %v320
        %v450 = vpack.c.b16 %v443, %v442
        %v451 = vpack.c.b16 %v445, %v444
        %v452 = vpack.c.b16 %v447, %v446
        %v453 = vpack.c.b16 %v449, %v448
        %v455 = vsel %vm352, %v450, 0
        %v458 = vsel %vm352, %v451, 0
        %v461 = vsel %vm352, %v452, 0
        %v464 = vsel %vm352, %v453, 0
        %v467 = vsel %vm365, %v321, 0
        %469 = vmatprep.subr.bf16.mxu0 0
        %470 = vmatpush1.bf16.msra.mxu0 %v467
        %471 = vmatprep.subr.bf16.mxu0 0
        %472 = vmatpush1.bf16.msra.mxu0 0
        %473 = vmatprep.subr.bf16.mxu0 0
        %474 = vmatpush1.bf16.msra.mxu0 0
        %475 = vmatprep.subr.bf16.mxu0 0
        %476 = vmatpush1.bf16.msra.mxu0 0
        %477 = vmatprep.subr.bf16.mxu0 0
        %478 = vmatpush1.bf16.msra.mxu0 0
        %479 = vmatprep.subr.bf16.mxu0 0
        %480 = vmatpush1.bf16.msra.mxu0 0
        %481 = vmatprep.subr.bf16.mxu0 0
        %482 = vmatpush1.bf16.msra.mxu0 0
        %483 = vmatprep.subr.bf16.mxu0 0
        %484 = vmatpush1.bf16.msra.mxu0 0
        %485 = vmatprep.subr.bf16.mxu0 0
        %486 = vmatpush1.bf16.msra.mxu0 0
        %487 = vmatprep.subr.bf16.mxu0 0
        %488 = vmatpush1.bf16.msra.mxu0 0
        %489 = vmatprep.subr.bf16.mxu0 0
        %490 = vmatpush1.bf16.msra.mxu0 0
        %491 = vmatprep.subr.bf16.mxu0 0
        %492 = vmatpush1.bf16.msra.mxu0 0
        %493 = vmatprep.subr.bf16.mxu0 0
        %494 = vmatpush1.bf16.msra.mxu0 0
        %495 = vmatprep.subr.bf16.mxu0 0
        %496 = vmatpush1.bf16.msra.mxu0 0
        %497 = vmatprep.subr.bf16.mxu0 0
        %498 = vmatpush1.bf16.msra.mxu0 0
        %499 = vmatprep.subr.bf16.mxu0 0
        %500 = vmatpush1.bf16.msra.mxu0 0
        %501 = vmatprep.mubr.bf16.mxu0 0
        %502 = vmatmul.mubr.bf16.gmra.mrb[0].mxu0 %v455
        %v503 = vpop.f32.mrb[0].mxu0
        %v504 = vadd.f32 %v404, %v503
        %v505 = vpop.f32.mrb[0].mxu0
        %v506 = vpop.f32.mrb[0].mxu0
        %v507 = vadd.f32 %v407, %v506
        %v508 = vpop.f32.mrb[0].mxu0
        %509 = vmatprep.mubr.bf16.mxu0 0
        %510 = vmatmul.mubr.bf16.gmra.mrb[0].mxu0 %v458
        %v511 = vpop.f32.mrb[0].mxu0
        %v512 = vadd.f32 %v412, %v511
        %v513 = vpop.f32.mrb[0].mxu0
        %v514 = vpop.f32.mrb[0].mxu0
        %v515 = vadd.f32 %v415, %v514
        %v516 = vpop.f32.mrb[0].mxu0
        %517 = vmatprep.mubr.bf16.mxu0 0
        %518 = vmatmul.mubr.bf16.gmra.mrb[0].mxu0 %v461
        %v519 = vpop.f32.mrb[0].mxu0
        %v520 = vadd.f32 %v420, %v519
        %v521 = vpop.f32.mrb[0].mxu0
        %v522 = vpop.f32.mrb[0].mxu0
        %v523 = vadd.f32 %v423, %v522
        %v524 = vpop.f32.mrb[0].mxu0
        %525 = vmatprep.mubr.bf16.mxu0 0
        %526 = vmatmul.mubr.bf16.gmra.mrb[0].mxu0 %v464
        %v527 = vpop.f32.mrb[0].mxu0
        %v528 = vadd.f32 %v428, %v527
        %v529 = vpop.f32.mrb[0].mxu0
        %v530 = vpop.f32.mrb[0].mxu0
        %v531 = vadd.f32 %v431, %v530
        %v532 = vpop.f32.mrb[0].mxu0
        %533 = vdwg.mxu0
        %v534 = vld [vmem:[%s264] sm:$0xf]
        %v535 = vld [vmem:[%s264 + $0x4] sm:$0x1]
        %v536 = vld [vmem:[%s264 + $0x10] sm:$0xf]
        %v537 = vld [vmem:[%s264 + $0x14] sm:$0x1]
        %v538 = vld [vmem:[%s264 + $0x20] sm:$0xf]
        %v539 = vld [vmem:[%s264 + $0x24] sm:$0x1]
        %v540 = vld [vmem:[%s264 + $0x30] sm:$0xf]
        %v541 = vld [vmem:[%s264 + $0x34] sm:$0x1]
        %v542 = vld [vmem:[%s264 + $0x40] sm:$0xf]
        %v543 = vld [vmem:[%s264 + $0x44] sm:$0x1]
        %v544 = vld [vmem:[%s264 + $0x50] sm:$0xf]
        %v545 = vld [vmem:[%s264 + $0x54] sm:$0x1]
        %v546 = vld [vmem:[%s264 + $0x60] sm:$0xf]
        %v547 = vld [vmem:[%s264 + $0x64] sm:$0x1]
        %v548 = vld [vmem:[%s264 + $0x70] sm:$0xf]
        %v549 = vld [vmem:[%s264 + $0x74] sm:$0x1]
        %vm550 = vsmask.f32 3328
        %vm551 = vsmask.f32 7440
        %vm552 = vmor %vm550, %vm551
        %v554 = vshrl.u32 %v534, 16
        %v556 = vrot.slane %v554, 4
        %v557 = vshll.u32 %v534, 16
        %v559 = vrot.slane %v557, 5
        %v560 = vor.u32 %v556, %v559
        %v561 = vrot.slane %v560, 4
        %v563 = vshll.u32 %v535, 16
        %v565 = vrot.slane %v563, 5
        %v566 = vsel %vm552, %v561, %v565
        %v568 = vshrl.u32 %v536, 16
        %v570 = vrot.slane %v568, 4
        %v571 = vshll.u32 %v536, 16
        %v573 = vrot.slane %v571, 5
        %v574 = vor.u32 %v570, %v573
        %v575 = vrot.slane %v574, 4
        %v577 = vshll.u32 %v537, 16
        %v579 = vrot.slane %v577, 5
        %v580 = vsel %vm552, %v575, %v579
        %v582 = vshrl.u32 %v538, 16
        %v584 = vrot.slane %v582, 4
        %v585 = vshll.u32 %v538, 16
        %v587 = vrot.slane %v585, 5
        %v588 = vor.u32 %v584, %v587
        %v589 = vrot.slane %v588, 4
        %v591 = vshll.u32 %v539, 16
        %v593 = vrot.slane %v591, 5
        %v594 = vsel %vm552, %v589, %v593
        %v596 = vshrl.u32 %v540, 16
        %v598 = vrot.slane %v596, 4
        %v599 = vshll.u32 %v540, 16
        %v601 = vrot.slane %v599, 5
        %v602 = vor.u32 %v598, %v601
        %v603 = vrot.slane %v602, 4
        %v605 = vshll.u32 %v541, 16
        %v607 = vrot.slane %v605, 5
        %v608 = vsel %vm552, %v603, %v607
        %v610 = vshrl.u32 %v542, 16
        %v612 = vrot.slane %v610, 4
        %v613 = vshll.u32 %v542, 16
        %v615 = vrot.slane %v613, 5
        %v616 = vor.u32 %v612, %v615
        %v617 = vrot.slane %v616, 4
        %v619 = vshll.u32 %v543, 16
        %v621 = vrot.slane %v619, 5
        %v622 = vsel %vm552, %v617, %v621
        %v624 = vshrl.u32 %v544, 16
        %v626 = vrot.slane %v624, 4
        %v627 = vshll.u32 %v544, 16
        %v629 = vrot.slane %v627, 5
        %v630 = vor.u32 %v626, %v629
        %v631 = vrot.slane %v630, 4
        %v633 = vshll.u32 %v545, 16
        %v635 = vrot.slane %v633, 5
        %v636 = vsel %vm552, %v631, %v635
        %v638 = vshrl.u32 %v546, 16
        %v640 = vrot.slane %v638, 4
        %v641 = vshll.u32 %v546, 16
        %v643 = vrot.slane %v641, 5
        %v644 = vor.u32 %v640, %v643
        %v645 = vrot.slane %v644, 4
        %v647 = vshll.u32 %v547, 16
        %v649 = vrot.slane %v647, 5
        %v650 = vsel %vm552, %v645, %v649
        %v652 = vshrl.u32 %v548, 16
        %v654 = vrot.slane %v652, 4
        %v655 = vshll.u32 %v548, 16
        %v657 = vrot.slane %v655, 5
        %v658 = vor.u32 %v654, %v657
        %v659 = vrot.slane %v658, 4
        %v661 = vshll.u32 %v549, 16
        %v663 = vrot.slane %v661, 5
        %v664 = vsel %vm552, %v659, %v663
        %s665 = scalar_lea.vmem [#allocation7], 4
        %v666 = vld [vmem:[%s665] sm:$0x3]
        %v667 = vunpack.c.l.b16 %v566
        %v668 = vunpack.c.l.b16 %v580
        %v669 = vunpack.c.l.b16 %v594
        %v670 = vunpack.c.l.b16 %v608
        %v671 = vunpack.c.l.b16 %v622
        %v672 = vunpack.c.l.b16 %v636
        %v673 = vunpack.c.l.b16 %v650
        %v674 = vunpack.c.l.b16 %v664
        %v675 = vpack.c.b16 %v668, %v667
        %v676 = vpack.c.b16 %v670, %v669
        %v677 = vpack.c.b16 %v672, %v671
        %v678 = vpack.c.b16 %v674, %v673
        %v680 = vsel %vm352, %v675, 0
        %v683 = vsel %vm352, %v676, 0
        %v686 = vsel %vm352, %v677, 0
        %v689 = vsel %vm352, %v678, 0
        %v692 = vsel %vm365, %v666, 0
        %694 = vmatprep.subr.bf16.mxu0 0
        %695 = vmatpush1.bf16.msra.mxu0 %v692
        %696 = vmatprep.subr.bf16.mxu0 0
        %697 = vmatpush1.bf16.msra.mxu0 0
        %698 = vmatprep.subr.bf16.mxu0 0
        %699 = vmatpush1.bf16.msra.mxu0 0
        %700 = vmatprep.subr.bf16.mxu0 0
        %701 = vmatpush1.bf16.msra.mxu0 0
        %702 = vmatprep.subr.bf16.mxu0 0
        %703 = vmatpush1.bf16.msra.mxu0 0
        %704 = vmatprep.subr.bf16.mxu0 0
        %705 = vmatpush1.bf16.msra.mxu0 0
        %706 = vmatprep.subr.bf16.mxu0 0
        %707 = vmatpush1.bf16.msra.mxu0 0
        %708 = vmatprep.subr.bf16.mxu0 0
        %709 = vmatpush1.bf16.msra.mxu0 0
        %710 = vmatprep.subr.bf16.mxu0 0
        %711 = vmatpush1.bf16.msra.mxu0 0
        %712 = vmatprep.subr.bf16.mxu0 0
        %713 = vmatpush1.bf16.msra.mxu0 0
        %714 = vmatprep.subr.bf16.mxu0 0
        %715 = vmatpush1.bf16.msra.mxu0 0
        %716 = vmatprep.subr.bf16.mxu0 0
        %717 = vmatpush1.bf16.msra.mxu0 0
        %718 = vmatprep.subr.bf16.mxu0 0
        %719 = vmatpush1.bf16.msra.mxu0 0
        %720 = vmatprep.subr.bf16.mxu0 0
        %721 = vmatpush1.bf16.msra.mxu0 0
        %722 = vmatprep.subr.bf16.mxu0 0
        %723 = vmatpush1.bf16.msra.mxu0 0
        %724 = vmatprep.subr.bf16.mxu0 0
        %725 = vmatpush1.bf16.msra.mxu0 0
        %726 = vmatprep.mubr.bf16.mxu0 0
        %727 = vmatmul.mubr.bf16.gmra.mrb[0].mxu0 %v680
        %v728 = vpop.f32.mrb[0].mxu0
        %v729 = vadd.f32 0.0, %v728
        %v730 = vpop.f32.mrb[0].mxu0
        %v731 = vpop.f32.mrb[0].mxu0
        %v732 = vadd.f32 0.0, %v731
        %v733 = vpop.f32.mrb[0].mxu0
        %734 = vmatprep.mubr.bf16.mxu0 0
        %735 = vmatmul.mubr.bf16.gmra.mrb[0].mxu0 %v683
        %v736 = vpop.f32.mrb[0].mxu0
        %v737 = vadd.f32 0.0, %v736
        %v738 = vpop.f32.mrb[0].mxu0
        %v739 = vpop.f32.mrb[0].mxu0
        %v740 = vadd.f32 0.0, %v739
        %v741 = vpop.f32.mrb[0].mxu0
        %742 = vmatprep.mubr.bf16.mxu0 0
        %743 = vmatmul.mubr.bf16.gmra.mrb[0].mxu0 %v686
        %v744 = vpop.f32.mrb[0].mxu0
        %v745 = vadd.f32 0.0, %v744
        %v746 = vpop.f32.mrb[0].mxu0
        %v747 = vpop.f32.mrb[0].mxu0
        %v748 = vadd.f32 0.0, %v747
        %v749 = vpop.f32.mrb[0].mxu0
        %750 = vmatprep.mubr.bf16.mxu0 0
        %751 = vmatmul.mubr.bf16.gmra.mrb[0].mxu0 %v689
        %v752 = vpop.f32.mrb[0].mxu0
        %v753 = vadd.f32 0.0, %v752
        %v754 = vpop.f32.mrb[0].mxu0
        %v755 = vpop.f32.mrb[0].mxu0
        %v756 = vadd.f32 0.0, %v755
        %v757 = vpop.f32.mrb[0].mxu0
        %758 = vdwg.mxu0
        %v759 = vadd.f32 %v504, %v729
        %v760 = vadd.f32 %v507, %v732
        %v761 = vadd.f32 %v512, %v737
        %v762 = vadd.f32 %v515, %v740
        %v763 = vadd.f32 %v520, %v745
        %v764 = vadd.f32 %v523, %v748
        %v765 = vadd.f32 %v528, %v753
        %v766 = vadd.f32 %v531, %v756
        %s767 = scalar_lea.vmem %s264, 8 [#allocation2]
        %v768 = vld [vmem:[%s767] sm:$0xf]
        %v769 = vld [vmem:[%s767 + $0x10] sm:$0xf]
        %v770 = vld [vmem:[%s767 + $0x20] sm:$0xf]
        %v771 = vld [vmem:[%s767 + $0x30] sm:$0xf]
        %v772 = vld [vmem:[%s767 + $0x40] sm:$0xf]
        %v773 = vld [vmem:[%s767 + $0x50] sm:$0xf]
        %v774 = vld [vmem:[%s767 + $0x60] sm:$0xf]
        %v775 = vld [vmem:[%s767 + $0x70] sm:$0xf]
        %s776 = scalar_lea.vmem [#allocation7], 6
        %v777 = vld [vmem:[%s776] sm:$0x3]
        %v786 = vunpack.c.l.b16 %v768
        %v787 = vunpack.c.l.b16 %v769
        %v788 = vunpack.c.l.b16 %v770
        %v789 = vunpack.c.l.b16 %v771
        %v790 = vunpack.c.l.b16 %v772
        %v791 = vunpack.c.l.b16 %v773
        %v792 = vunpack.c.l.b16 %v774
        %v793 = vunpack.c.l.b16 %v775
        %v794 = vpack.c.b16 %v787, %v786
        %v795 = vpack.c.b16 %v789, %v788
        %v796 = vpack.c.b16 %v791, %v790
        %v797 = vpack.c.b16 %v793, %v792
        %v799 = vsel %vm352, %v794, 0
        %v802 = vsel %vm352, %v795, 0
        %v805 = vsel %vm352, %v796, 0
        %v808 = vsel %vm352, %v797, 0
        %v811 = vsel %vm365, %v777, 0
        %813 = vmatprep.subr.bf16.mxu0 0
        %814 = vmatpush1.bf16.msra.mxu0 %v811
        %815 = vmatprep.subr.bf16.mxu0 0
        %816 = vmatpush1.bf16.msra.mxu0 0
        %817 = vmatprep.subr.bf16.mxu0 0
        %818 = vmatpush1.bf16.msra.mxu0 0
        %819 = vmatprep.subr.bf16.mxu0 0
        %820 = vmatpush1.bf16.msra.mxu0 0
        %821 = vmatprep.subr.bf16.mxu0 0
        %822 = vmatpush1.bf16.msra.mxu0 0
        %823 = vmatprep.subr.bf16.mxu0 0
        %824 = vmatpush1.bf16.msra.mxu0 0
        %825 = vmatprep.subr.bf16.mxu0 0
        %826 = vmatpush1.bf16.msra.mxu0 0
        %827 = vmatprep.subr.bf16.mxu0 0
        %828 = vmatpush1.bf16.msra.mxu0 0
        %829 = vmatprep.subr.bf16.mxu0 0
        %830 = vmatpush1.bf16.msra.mxu0 0
        %831 = vmatprep.subr.bf16.mxu0 0
        %832 = vmatpush1.bf16.msra.mxu0 0
        %833 = vmatprep.subr.bf16.mxu0 0
        %834 = vmatpush1.bf16.msra.mxu0 0
        %835 = vmatprep.subr.bf16.mxu0 0
        %836 = vmatpush1.bf16.msra.mxu0 0
        %837 = vmatprep.subr.bf16.mxu0 0
        %838 = vmatpush1.bf16.msra.mxu0 0
        %839 = vmatprep.subr.bf16.mxu0 0
        %840 = vmatpush1.bf16.msra.mxu0 0
        %841 = vmatprep.subr.bf16.mxu0 0
        %842 = vmatpush1.bf16.msra.mxu0 0
        %843 = vmatprep.subr.bf16.mxu0 0
        %844 = vmatpush1.bf16.msra.mxu0 0
        %845 = vmatprep.mubr.bf16.mxu0 0
        %846 = vmatmul.mubr.bf16.gmra.mrb[0].mxu0 %v799
        %v847 = vpop.f32.mrb[0].mxu0
        %v848 = vadd.f32 0.0, %v847
        %v849 = vpop.f32.mrb[0].mxu0
        %v850 = vpop.f32.mrb[0].mxu0
        %v851 = vadd.f32 0.0, %v850
        %v852 = vpop.f32.mrb[0].mxu0
        %853 = vmatprep.mubr.bf16.mxu0 0
        %854 = vmatmul.mubr.bf16.gmra.mrb[0].mxu0 %v802
        %v855 = vpop.f32.mrb[0].mxu0
        %v856 = vadd.f32 0.0, %v855
        %v857 = vpop.f32.mrb[0].mxu0
        %v858 = vpop.f32.mrb[0].mxu0
        %v859 = vadd.f32 0.0, %v858
        %v860 = vpop.f32.mrb[0].mxu0
        %861 = vmatprep.mubr.bf16.mxu0 0
        %862 = vmatmul.mubr.bf16.gmra.mrb[0].mxu0 %v805
        %v863 = vpop.f32.mrb[0].mxu0
        %v864 = vadd.f32 0.0, %v863
        %v865 = vpop.f32.mrb[0].mxu0
        %v866 = vpop.f32.mrb[0].mxu0
        %v867 = vadd.f32 0.0, %v866
        %v868 = vpop.f32.mrb[0].mxu0
        %869 = vmatprep.mubr.bf16.mxu0 0
        %870 = vmatmul.mubr.bf16.gmra.mrb[0].mxu0 %v808
        %v871 = vpop.f32.mrb[0].mxu0
        %v872 = vadd.f32 0.0, %v871
        %v873 = vpop.f32.mrb[0].mxu0
        %v874 = vpop.f32.mrb[0].mxu0
        %v875 = vadd.f32 0.0, %v874
        %v876 = vpop.f32.mrb[0].mxu0
        %877 = vdwg.mxu0
        %v878 = vadd.f32 %v759, %v848
        %v879 = vadd.f32 %v760, %v851
        %v880 = vadd.f32 %v761, %v856
        %v881 = vadd.f32 %v762, %v859
        %v882 = vadd.f32 %v763, %v864
        %v883 = vadd.f32 %v764, %v867
        %v884 = vadd.f32 %v765, %v872
        %v885 = vadd.f32 %v766, %v875
        %s886 = scalar_lea.vmem %s273, 8 [#allocation5]
        %v887 = vld [vmem:[%s886] sm:$0xf]
        %v888 = vld [vmem:[%s886 + $0x10] sm:$0xf]
        %v889 = vld [vmem:[%s886 + $0x20] sm:$0xf]
        %v890 = vld [vmem:[%s886 + $0x30] sm:$0xf]
        %v891 = vld [vmem:[%s886 + $0x40] sm:$0xf]
        %v892 = vld [vmem:[%s886 + $0x50] sm:$0xf]
        %v893 = vld [vmem:[%s886 + $0x60] sm:$0xf]
        %v894 = vld [vmem:[%s886 + $0x70] sm:$0xf]
        %s895 = scalar_lea.vmem [#allocation7], 8
        %v896 = vld [vmem:[%s895] sm:$0x3]
        %v905 = vunpack.c.l.b16 %v887
        %v906 = vunpack.c.l.b16 %v888
        %v907 = vunpack.c.l.b16 %v889
        %v908 = vunpack.c.l.b16 %v890
        %v909 = vunpack.c.l.b16 %v891
        %v910 = vunpack.c.l.b16 %v892
        %v911 = vunpack.c.l.b16 %v893
        %v912 = vunpack.c.l.b16 %v894
        %v913 = vpack.c.b16 %v906, %v905
        %v914 = vpack.c.b16 %v908, %v907
        %v915 = vpack.c.b16 %v910, %v909
        %v916 = vpack.c.b16 %v912, %v911
        %v918 = vsel %vm352, %v913, 0
        %v921 = vsel %vm352, %v914, 0
        %v924 = vsel %vm352, %v915, 0
        %v927 = vsel %vm352, %v916, 0
        %v930 = vsel %vm365, %v896, 0
        %932 = vmatprep.subr.bf16.mxu0 0
        %933 = vmatpush1.bf16.msra.mxu0 %v930
        %934 = vmatprep.subr.bf16.mxu0 0
        %935 = vmatpush1.bf16.msra.mxu0 0
        %936 = vmatprep.subr.bf16.mxu0 0
        %937 = vmatpush1.bf16.msra.mxu0 0
        %938 = vmatprep.subr.bf16.mxu0 0
        %939 = vmatpush1.bf16.msra.mxu0 0
        %940 = vmatprep.subr.bf16.mxu0 0
        %941 = vmatpush1.bf16.msra.mxu0 0
        %942 = vmatprep.subr.bf16.mxu0 0
        %943 = vmatpush1.bf16.msra.mxu0 0
        %944 = vmatprep.subr.bf16.mxu0 0
        %945 = vmatpush1.bf16.msra.mxu0 0
        %946 = vmatprep.subr.bf16.mxu0 0
        %947 = vmatpush1.bf16.msra.mxu0 0
        %948 = vmatprep.subr.bf16.mxu0 0
        %949 = vmatpush1.bf16.msra.mxu0 0
        %950 = vmatprep.subr.bf16.mxu0 0
        %951 = vmatpush1.bf16.msra.mxu0 0
        %952 = vmatprep.subr.bf16.mxu0 0
        %953 = vmatpush1.bf16.msra.mxu0 0
        %954 = vmatprep.subr.bf16.mxu0 0
        %955 = vmatpush1.bf16.msra.mxu0 0
        %956 = vmatprep.subr.bf16.mxu0 0
        %957 = vmatpush1.bf16.msra.mxu0 0
        %958 = vmatprep.subr.bf16.mxu0 0
        %959 = vmatpush1.bf16.msra.mxu0 0
        %960 = vmatprep.subr.bf16.mxu0 0
        %961 = vmatpush1.bf16.msra.mxu0 0
        %962 = vmatprep.subr.bf16.mxu0 0
        %963 = vmatpush1.bf16.msra.mxu0 0
        %964 = vmatprep.mubr.bf16.mxu0 0
        %965 = vmatmul.mubr.bf16.gmra.mrb[0].mxu0 %v918
        %v966 = vpop.f32.mrb[0].mxu0
        %v967 = vadd.f32 0.0, %v966
        %v968 = vpop.f32.mrb[0].mxu0
        %v969 = vpop.f32.mrb[0].mxu0
        %v970 = vadd.f32 0.0, %v969
        %v971 = vpop.f32.mrb[0].mxu0
        %972 = vmatprep.mubr.bf16.mxu0 0
        %973 = vmatmul.mubr.bf16.gmra.mrb[0].mxu0 %v921
        %v974 = vpop.f32.mrb[0].mxu0
        %v975 = vadd.f32 0.0, %v974
        %v976 = vpop.f32.mrb[0].mxu0
        %v977 = vpop.f32.mrb[0].mxu0
        %v978 = vadd.f32 0.0, %v977
        %v979 = vpop.f32.mrb[0].mxu0
        %980 = vmatprep.mubr.bf16.mxu0 0
        %981 = vmatmul.mubr.bf16.gmra.mrb[0].mxu0 %v924
        %v982 = vpop.f32.mrb[0].mxu0
        %v983 = vadd.f32 0.0, %v982
        %v984 = vpop.f32.mrb[0].mxu0
        %v985 = vpop.f32.mrb[0].mxu0
        %v986 = vadd.f32 0.0, %v985
        %v987 = vpop.f32.mrb[0].mxu0
        %988 = vmatprep.mubr.bf16.mxu0 0
        %989 = vmatmul.mubr.bf16.gmra.mrb[0].mxu0 %v927
        %v990 = vpop.f32.mrb[0].mxu0
        %v991 = vadd.f32 0.0, %v990
        %v992 = vpop.f32.mrb[0].mxu0
        %v993 = vpop.f32.mrb[0].mxu0
        %v994 = vadd.f32 0.0, %v993
        %v995 = vpop.f32.mrb[0].mxu0
        %996 = vdwg.mxu0
        %v997 = vadd.f32 %v878, %v967
        %v998 = vadd.f32 %v879, %v970
        %v999 = vadd.f32 %v880, %v975
        %v1000 = vadd.f32 %v881, %v978
        %v1001 = vadd.f32 %v882, %v983
        %v1002 = vadd.f32 %v883, %v986
        %v1003 = vadd.f32 %v884, %v991
        %v1004 = vadd.f32 %v885, %v994
        %v1005 = vld [vmem:[%s767] sm:$0xf]
        %v1006 = vld [vmem:[%s767 + $0x4] sm:$0x1]
        %v1007 = vld [vmem:[%s767 + $0x10] sm:$0xf]
        %v1008 = vld [vmem:[%s767 + $0x14] sm:$0x1]
        %v1009 = vld [vmem:[%s767 + $0x20] sm:$0xf]
        %v1010 = vld [vmem:[%s767 + $0x24] sm:$0x1]
        %v1011 = vld [vmem:[%s767 + $0x30] sm:$0xf]
        %v1012 = vld [vmem:[%s767 + $0x34] sm:$0x1]
        %v1013 = vld [vmem:[%s767 + $0x40] sm:$0xf]
        %v1014 = vld [vmem:[%s767 + $0x44] sm:$0x1]
        %v1015 = vld [vmem:[%s767 + $0x50] sm:$0xf]
        %v1016 = vld [vmem:[%s767 + $0x54] sm:$0x1]
        %v1017 = vld [vmem:[%s767 + $0x60] sm:$0xf]
        %v1018 = vld [vmem:[%s767 + $0x64] sm:$0x1]
        %v1019 = vld [vmem:[%s767 + $0x70] sm:$0xf]
        %v1020 = vld [vmem:[%s767 + $0x74] sm:$0x1]
        %v1022 = vshrl.u32 %v1005, 16
        %v1024 = vrot.slane %v1022, 4
        %v1025 = vshll.u32 %v1005, 16
        %v1027 = vrot.slane %v1025, 5
        %v1028 = vor.u32 %v1024, %v1027
        %v1029 = vrot.slane %v1028, 4
        %v1031 = vshll.u32 %v1006, 16
        %v1033 = vrot.slane %v1031, 5
        %v1034 = vsel %vm552, %v1029, %v1033
        %v1036 = vshrl.u32 %v1007, 16
        %v1038 = vrot.slane %v1036, 4
        %v1039 = vshll.u32 %v1007, 16
        %v1041 = vrot.slane %v1039, 5
        %v1042 = vor.u32 %v1038, %v1041
        %v1043 = vrot.slane %v1042, 4
        %v1045 = vshll.u32 %v1008, 16
        %v1047 = vrot.slane %v1045, 5
        %v1048 = vsel %vm552, %v1043, %v1047
        %v1050 = vshrl.u32 %v1009, 16
        %v1052 = vrot.slane %v1050, 4
        %v1053 = vshll.u32 %v1009, 16
        %v1055 = vrot.slane %v1053, 5
        %v1056 = vor.u32 %v1052, %v1055
        %v1057 = vrot.slane %v1056, 4
        %v1059 = vshll.u32 %v1010, 16
        %v1061 = vrot.slane %v1059, 5
        %v1062 = vsel %vm552, %v1057, %v1061
        %v1064 = vshrl.u32 %v1011, 16
        %v1066 = vrot.slane %v1064, 4
        %v1067 = vshll.u32 %v1011, 16
        %v1069 = vrot.slane %v1067, 5
        %v1070 = vor.u32 %v1066, %v1069
        %v1071 = vrot.slane %v1070, 4
        %v1073 = vshll.u32 %v1012, 16
        %v1075 = vrot.slane %v1073, 5
        %v1076 = vsel %vm552, %v1071, %v1075
        %v1078 = vshrl.u32 %v1013, 16
        %v1080 = vrot.slane %v1078, 4
        %v1081 = vshll.u32 %v1013, 16
        %v1083 = vrot.slane %v1081, 5
        %v1084 = vor.u32 %v1080, %v1083
        %v1085 = vrot.slane %v1084, 4
        %v1087 = vshll.u32 %v1014, 16
        %v1089 = vrot.slane %v1087, 5
        %v1090 = vsel %vm552, %v1085, %v1089
        %v1092 = vshrl.u32 %v1015, 16
        %v1094 = vrot.slane %v1092, 4
        %v1095 = vshll.u32 %v1015, 16
        %v1097 = vrot.slane %v1095, 5
        %v1098 = vor.u32 %v1094, %v1097
        %v1099 = vrot.slane %v1098, 4
        %v1101 = vshll.u32 %v1016, 16
        %v1103 = vrot.slane %v1101, 5
        %v1104 = vsel %vm552, %v1099, %v1103
        %v1106 = vshrl.u32 %v1017, 16
        %v1108 = vrot.slane %v1106, 4
        %v1109 = vshll.u32 %v1017, 16
        %v1111 = vrot.slane %v1109, 5
        %v1112 = vor.u32 %v1108, %v1111
        %v1113 = vrot.slane %v1112, 4
        %v1115 = vshll.u32 %v1018, 16
        %v1117 = vrot.slane %v1115, 5
        %v1118 = vsel %vm552, %v1113, %v1117
        %v1120 = vshrl.u32 %v1019, 16
        %v1122 = vrot.slane %v1120, 4
        %v1123 = vshll.u32 %v1019, 16
        %v1125 = vrot.slane %v1123, 5
        %v1126 = vor.u32 %v1122, %v1125
        %v1127 = vrot.slane %v1126, 4
        %v1129 = vshll.u32 %v1020, 16
        %v1131 = vrot.slane %v1129, 5
        %v1132 = vsel %vm552, %v1127, %v1131
        %s1133 = scalar_lea.vmem [#allocation7], 10
        %v1134 = vld [vmem:[%s1133] sm:$0x3]
        %v1135 = vunpack.c.l.b16 %v1034
        %v1136 = vunpack.c.l.b16 %v1048
        %v1137 = vunpack.c.l.b16 %v1062
        %v1138 = vunpack.c.l.b16 %v1076
        %v1139 = vunpack.c.l.b16 %v1090
        %v1140 = vunpack.c.l.b16 %v1104
        %v1141 = vunpack.c.l.b16 %v1118
        %v1142 = vunpack.c.l.b16 %v1132
        %v1143 = vpack.c.b16 %v1136, %v1135
        %v1144 = vpack.c.b16 %v1138, %v1137
        %v1145 = vpack.c.b16 %v1140, %v1139
        %v1146 = vpack.c.b16 %v1142, %v1141
        %v1148 = vsel %vm352, %v1143, 0
        %v1151 = vsel %vm352, %v1144, 0
        %v1154 = vsel %vm352, %v1145, 0
        %v1157 = vsel %vm352, %v1146, 0
        %v1160 = vsel %vm365, %v1134, 0
        %1162 = vmatprep.subr.bf16.mxu0 0
        %1163 = vmatpush1.bf16.msra.mxu0 %v1160
        %1164 = vmatprep.subr.bf16.mxu0 0
        %1165 = vmatpush1.bf16.msra.mxu0 0
        %1166 = vmatprep.subr.bf16.mxu0 0
        %1167 = vmatpush1.bf16.msra.mxu0 0
        %1168 = vmatprep.subr.bf16.mxu0 0
        %1169 = vmatpush1.bf16.msra.mxu0 0
        %1170 = vmatprep.subr.bf16.mxu0 0
        %1171 = vmatpush1.bf16.msra.mxu0 0
        %1172 = vmatprep.subr.bf16.mxu0 0
        %1173 = vmatpush1.bf16.msra.mxu0 0
        %1174 = vmatprep.subr.bf16.mxu0 0
        %1175 = vmatpush1.bf16.msra.mxu0 0
        %1176 = vmatprep.subr.bf16.mxu0 0
        %1177 = vmatpush1.bf16.msra.mxu0 0
        %1178 = vmatprep.subr.bf16.mxu0 0
        %1179 = vmatpush1.bf16.msra.mxu0 0
        %1180 = vmatprep.subr.bf16.mxu0 0
        %1181 = vmatpush1.bf16.msra.mxu0 0
        %1182 = vmatprep.subr.bf16.mxu0 0
        %1183 = vmatpush1.bf16.msra.mxu0 0
        %1184 = vmatprep.subr.bf16.mxu0 0
        %1185 = vmatpush1.bf16.msra.mxu0 0
        %1186 = vmatprep.subr.bf16.mxu0 0
        %1187 = vmatpush1.bf16.msra.mxu0 0
        %1188 = vmatprep.subr.bf16.mxu0 0
        %1189 = vmatpush1.bf16.msra.mxu0 0
        %1190 = vmatprep.subr.bf16.mxu0 0
        %1191 = vmatpush1.bf16.msra.mxu0 0
        %1192 = vmatprep.subr.bf16.mxu0 0
        %1193 = vmatpush1.bf16.msra.mxu0 0
        %1194 = vmatprep.mubr.bf16.mxu0 0
        %1195 = vmatmul.mubr.bf16.gmra.mrb[0].mxu0 %v1148
        %v1196 = vpop.f32.mrb[0].mxu0
        %v1197 = vadd.f32 0.0, %v1196
        %v1198 = vpop.f32.mrb[0].mxu0
        %v1199 = vpop.f32.mrb[0].mxu0
        %v1200 = vadd.f32 0.0, %v1199
        %v1201 = vpop.f32.mrb[0].mxu0
        %1202 = vmatprep.mubr.bf16.mxu0 0
        %1203 = vmatmul.mubr.bf16.gmra.mrb[0].mxu0 %v1151
        %v1204 = vpop.f32.mrb[0].mxu0
        %v1205 = vadd.f32 0.0, %v1204
        %v1206 = vpop.f32.mrb[0].mxu0
        %v1207 = vpop.f32.mrb[0].mxu0
        %v1208 = vadd.f32 0.0, %v1207
        %v1209 = vpop.f32.mrb[0].mxu0
        %1210 = vmatprep.mubr.bf16.mxu0 0
        %1211 = vmatmul.mubr.bf16.gmra.mrb[0].mxu0 %v1154
        %v1212 = vpop.f32.mrb[0].mxu0
        %v1213 = vadd.f32 0.0, %v1212
        %v1214 = vpop.f32.mrb[0].mxu0
        %v1215 = vpop.f32.mrb[0].mxu0
        %v1216 = vadd.f32 0.0, %v1215
        %v1217 = vpop.f32.mrb[0].mxu0
        %1218 = vmatprep.mubr.bf16.mxu0 0
        %1219 = vmatmul.mubr.bf16.gmra.mrb[0].mxu0 %v1157
        %v1220 = vpop.f32.mrb[0].mxu0
        %v1221 = vadd.f32 0.0, %v1220
        %v1222 = vpop.f32.mrb[0].mxu0
        %v1223 = vpop.f32.mrb[0].mxu0
        %v1224 = vadd.f32 0.0, %v1223
        %v1225 = vpop.f32.mrb[0].mxu0
        %1226 = vdwg.mxu0
        %v1227 = vadd.f32 %v997, %v1197
        %v1228 = vadd.f32 %v998, %v1200
        %v1229 = vadd.f32 %v999, %v1205
        %v1230 = vadd.f32 %v1000, %v1208
        %v1231 = vadd.f32 %v1001, %v1213
        %v1232 = vadd.f32 %v1002, %v1216
        %v1233 = vadd.f32 %v1003, %v1221
        %v1234 = vadd.f32 %v1004, %v1224
        %s1235 = scalar_lea.vmem %s264, 16 [#allocation2]
        %v1236 = vld [vmem:[%s1235] sm:$0xf]
        %v1237 = vld [vmem:[%s1235 + $0x10] sm:$0xf]
        %v1238 = vld [vmem:[%s1235 + $0x20] sm:$0xf]
        %v1239 = vld [vmem:[%s1235 + $0x30] sm:$0xf]
        %v1240 = vld [vmem:[%s1235 + $0x40] sm:$0xf]
        %v1241 = vld [vmem:[%s1235 + $0x50] sm:$0xf]
        %v1242 = vld [vmem:[%s1235 + $0x60] sm:$0xf]
        %v1243 = vld [vmem:[%s1235 + $0x70] sm:$0xf]
        %s1244 = scalar_lea.vmem [#allocation7], 12
        %v1245 = vld [vmem:[%s1244] sm:$0x3]
        %v1254 = vunpack.c.l.b16 %v1236
        %v1255 = vunpack.c.l.b16 %v1237
        %v1256 = vunpack.c.l.b16 %v1238
        %v1257 = vunpack.c.l.b16 %v1239
        %v1258 = vunpack.c.l.b16 %v1240
        %v1259 = vunpack.c.l.b16 %v1241
        %v1260 = vunpack.c.l.b16 %v1242
        %v1261 = vunpack.c.l.b16 %v1243
        %v1262 = vpack.c.b16 %v1255, %v1254
        %v1263 = vpack.c.b16 %v1257, %v1256
        %v1264 = vpack.c.b16 %v1259, %v1258
        %v1265 = vpack.c.b16 %v1261, %v1260
        %v1267 = vsel %vm352, %v1262, 0
        %v1270 = vsel %vm352, %v1263, 0
        %v1273 = vsel %vm352, %v1264, 0
        %v1276 = vsel %vm352, %v1265, 0
        %v1279 = vsel %vm365, %v1245, 0
        %1281 = vmatprep.subr.bf16.mxu0 0
        %1282 = vmatpush1.bf16.msra.mxu0 %v1279
        %1283 = vmatprep.subr.bf16.mxu0 0
        %1284 = vmatpush1.bf16.msra.mxu0 0
        %1285 = vmatprep.subr.bf16.mxu0 0
        %1286 = vmatpush1.bf16.msra.mxu0 0
        %1287 = vmatprep.subr.bf16.mxu0 0
        %1288 = vmatpush1.bf16.msra.mxu0 0
        %1289 = vmatprep.subr.bf16.mxu0 0
        %1290 = vmatpush1.bf16.msra.mxu0 0
        %1291 = vmatprep.subr.bf16.mxu0 0
        %1292 = vmatpush1.bf16.msra.mxu0 0
        %1293 = vmatprep.subr.bf16.mxu0 0
        %1294 = vmatpush1.bf16.msra.mxu0 0
        %1295 = vmatprep.subr.bf16.mxu0 0
        %1296 = vmatpush1.bf16.msra.mxu0 0
        %1297 = vmatprep.subr.bf16.mxu0 0
        %1298 = vmatpush1.bf16.msra.mxu0 0
        %1299 = vmatprep.subr.bf16.mxu0 0
        %1300 = vmatpush1.bf16.msra.mxu0 0
        %1301 = vmatprep.subr.bf16.mxu0 0
        %1302 = vmatpush1.bf16.msra.mxu0 0
        %1303 = vmatprep.subr.bf16.mxu0 0
        %1304 = vmatpush1.bf16.msra.mxu0 0
        %1305 = vmatprep.subr.bf16.mxu0 0
        %1306 = vmatpush1.bf16.msra.mxu0 0
        %1307 = vmatprep.subr.bf16.mxu0 0
        %1308 = vmatpush1.bf16.msra.mxu0 0
        %1309 = vmatprep.subr.bf16.mxu0 0
        %1310 = vmatpush1.bf16.msra.mxu0 0
        %1311 = vmatprep.subr.bf16.mxu0 0
        %1312 = vmatpush1.bf16.msra.mxu0 0
        %1313 = vmatprep.mubr.bf16.mxu0 0
        %1314 = vmatmul.mubr.bf16.gmra.mrb[0].mxu0 %v1267
        %v1315 = vpop.f32.mrb[0].mxu0
        %v1316 = vadd.f32 0.0, %v1315
        %v1317 = vpop.f32.mrb[0].mxu0
        %v1318 = vpop.f32.mrb[0].mxu0
        %v1319 = vadd.f32 0.0, %v1318
        %v1320 = vpop.f32.mrb[0].mxu0
        %1321 = vmatprep.mubr.bf16.mxu0 0
        %1322 = vmatmul.mubr.bf16.gmra.mrb[0].mxu0 %v1270
        %v1323 = vpop.f32.mrb[0].mxu0
        %v1324 = vadd.f32 0.0, %v1323
        %v1325 = vpop.f32.mrb[0].mxu0
        %v1326 = vpop.f32.mrb[0].mxu0
        %v1327 = vadd.f32 0.0, %v1326
        %v1328 = vpop.f32.mrb[0].mxu0
        %1329 = vmatprep.mubr.bf16.mxu0 0
        %1330 = vmatmul.mubr.bf16.gmra.mrb[0].mxu0 %v1273
        %v1331 = vpop.f32.mrb[0].mxu0
        %v1332 = vadd.f32 0.0, %v1331
        %v1333 = vpop.f32.mrb[0].mxu0
        %v1334 = vpop.f32.mrb[0].mxu0
        %v1335 = vadd.f32 0.0, %v1334
        %v1336 = vpop.f32.mrb[0].mxu0
        %1337 = vmatprep.mubr.bf16.mxu0 0
        %1338 = vmatmul.mubr.bf16.gmra.mrb[0].mxu0 %v1276
        %v1339 = vpop.f32.mrb[0].mxu0
        %v1340 = vadd.f32 0.0, %v1339
        %v1341 = vpop.f32.mrb[0].mxu0
        %v1342 = vpop.f32.mrb[0].mxu0
        %v1343 = vadd.f32 0.0, %v1342
        %v1344 = vpop.f32.mrb[0].mxu0
        %1345 = vdwg.mxu0
        %v1346 = vadd.f32 %v1227, %v1316
        %v1347 = vadd.f32 %v1228, %v1319
        %v1348 = vadd.f32 %v1229, %v1324
        %v1349 = vadd.f32 %v1230, %v1327
        %v1350 = vadd.f32 %v1231, %v1332
        %v1351 = vadd.f32 %v1232, %v1335
        %v1352 = vadd.f32 %v1233, %v1340
        %v1353 = vadd.f32 %v1234, %v1343
        %s1354 = scalar_lea.vmem %s273, 16 [#allocation5]
        %v1355 = vld [vmem:[%s1354] sm:$0xf]
        %v1356 = vld [vmem:[%s1354 + $0x10] sm:$0xf]
        %v1357 = vld [vmem:[%s1354 + $0x20] sm:$0xf]
        %v1358 = vld [vmem:[%s1354 + $0x30] sm:$0xf]
        %v1359 = vld [vmem:[%s1354 + $0x40] sm:$0xf]
        %v1360 = vld [vmem:[%s1354 + $0x50] sm:$0xf]
        %v1361 = vld [vmem:[%s1354 + $0x60] sm:$0xf]
        %v1362 = vld [vmem:[%s1354 + $0x70] sm:$0xf]
        %s1363 = scalar_lea.vmem [#allocation7], 14
        %v1364 = vld [vmem:[%s1363] sm:$0x3]
        %v1373 = vunpack.c.l.b16 %v1355
        %v1374 = vunpack.c.l.b16 %v1356
        %v1375 = vunpack.c.l.b16 %v1357
        %v1376 = vunpack.c.l.b16 %v1358
        %v1377 = vunpack.c.l.b16 %v1359
        %v1378 = vunpack.c.l.b16 %v1360
        %v1379 = vunpack.c.l.b16 %v1361
        %v1380 = vunpack.c.l.b16 %v1362
        %v1381 = vpack.c.b16 %v1374, %v1373
        %v1382 = vpack.c.b16 %v1376, %v1375
        %v1383 = vpack.c.b16 %v1378, %v1377
        %v1384 = vpack.c.b16 %v1380, %v1379
        %v1386 = vsel %vm352, %v1381, 0
        %v1389 = vsel %vm352, %v1382, 0
        %v1392 = vsel %vm352, %v1383, 0
        %v1395 = vsel %vm352, %v1384, 0
        %v1398 = vsel %vm365, %v1364, 0
        %1400 = vmatprep.subr.bf16.mxu0 0
        %1401 = vmatpush1.bf16.msra.mxu0 %v1398
        %1402 = vmatprep.subr.bf16.mxu0 0
        %1403 = vmatpush1.bf16.msra.mxu0 0
        %1404 = vmatprep.subr.bf16.mxu0 0
        %1405 = vmatpush1.bf16.msra.mxu0 0
        %1406 = vmatprep.subr.bf16.mxu0 0
        %1407 = vmatpush1.bf16.msra.mxu0 0
        %1408 = vmatprep.subr.bf16.mxu0 0
        %1409 = vmatpush1.bf16.msra.mxu0 0
        %1410 = vmatprep.subr.bf16.mxu0 0
        %1411 = vmatpush1.bf16.msra.mxu0 0
        %1412 = vmatprep.subr.bf16.mxu0 0
        %1413 = vmatpush1.bf16.msra.mxu0 0
        %1414 = vmatprep.subr.bf16.mxu0 0
        %1415 = vmatpush1.bf16.msra.mxu0 0
        %1416 = vmatprep.subr.bf16.mxu0 0
        %1417 = vmatpush1.bf16.msra.mxu0 0
        %1418 = vmatprep.subr.bf16.mxu0 0
        %1419 = vmatpush1.bf16.msra.mxu0 0
        %1420 = vmatprep.subr.bf16.mxu0 0
        %1421 = vmatpush1.bf16.msra.mxu0 0
        %1422 = vmatprep.subr.bf16.mxu0 0
        %1423 = vmatpush1.bf16.msra.mxu0 0
        %1424 = vmatprep.subr.bf16.mxu0 0
        %1425 = vmatpush1.bf16.msra.mxu0 0
        %1426 = vmatprep.subr.bf16.mxu0 0
        %1427 = vmatpush1.bf16.msra.mxu0 0
        %1428 = vmatprep.subr.bf16.mxu0 0
        %1429 = vmatpush1.bf16.msra.mxu0 0
        %1430 = vmatprep.subr.bf16.mxu0 0
        %1431 = vmatpush1.bf16.msra.mxu0 0
        %1432 = vmatprep.mubr.bf16.mxu0 0
        %1433 = vmatmul.mubr.bf16.gmra.mrb[0].mxu0 %v1386
        %v1434 = vpop.f32.mrb[0].mxu0
        %v1435 = vadd.f32 0.0, %v1434
        %v1436 = vpop.f32.mrb[0].mxu0
        %v1437 = vpop.f32.mrb[0].mxu0
        %v1438 = vadd.f32 0.0, %v1437
        %v1439 = vpop.f32.mrb[0].mxu0
        %1440 = vmatprep.mubr.bf16.mxu0 0
        %1441 = vmatmul.mubr.bf16.gmra.mrb[0].mxu0 %v1389
        %v1442 = vpop.f32.mrb[0].mxu0
        %v1443 = vadd.f32 0.0, %v1442
        %v1444 = vpop.f32.mrb[0].mxu0
        %v1445 = vpop.f32.mrb[0].mxu0
        %v1446 = vadd.f32 0.0, %v1445
        %v1447 = vpop.f32.mrb[0].mxu0
        %1448 = vmatprep.mubr.bf16.mxu0 0
        %1449 = vmatmul.mubr.bf16.gmra.mrb[0].mxu0 %v1392
        %v1450 = vpop.f32.mrb[0].mxu0
        %v1451 = vadd.f32 0.0, %v1450
        %v1452 = vpop.f32.mrb[0].mxu0
        %v1453 = vpop.f32.mrb[0].mxu0
        %v1454 = vadd.f32 0.0, %v1453
        %v1455 = vpop.f32.mrb[0].mxu0
        %1456 = vmatprep.mubr.bf16.mxu0 0
        %1457 = vmatmul.mubr.bf16.gmra.mrb[0].mxu0 %v1395
        %v1458 = vpop.f32.mrb[0].mxu0
        %v1459 = vadd.f32 0.0, %v1458
        %v1460 = vpop.f32.mrb[0].mxu0
        %v1461 = vpop.f32.mrb[0].mxu0
        %v1462 = vadd.f32 0.0, %v1461
        %v1463 = vpop.f32.mrb[0].mxu0
        %1464 = vdwg.mxu0
        %v1465 = vadd.f32 %v1346, %v1435
        %v1466 = vadd.f32 %v1347, %v1438
        %v1467 = vadd.f32 %v1348, %v1443
        %v1468 = vadd.f32 %v1349, %v1446
        %v1469 = vadd.f32 %v1350, %v1451
        %v1470 = vadd.f32 %v1351, %v1454
        %v1471 = vadd.f32 %v1352, %v1459
        %v1472 = vadd.f32 %v1353, %v1462
        %v1473 = vld [vmem:[%s1235] sm:$0xf]
        %v1474 = vld [vmem:[%s1235 + $0x4] sm:$0x1]
        %v1475 = vld [vmem:[%s1235 + $0x10] sm:$0xf]
        %v1476 = vld [vmem:[%s1235 + $0x14] sm:$0x1]
        %v1477 = vld [vmem:[%s1235 + $0x20] sm:$0xf]
        %v1478 = vld [vmem:[%s1235 + $0x24] sm:$0x1]
        %v1479 = vld [vmem:[%s1235 + $0x30] sm:$0xf]
        %v1480 = vld [vmem:[%s1235 + $0x34] sm:$0x1]
        %v1481 = vld [vmem:[%s1235 + $0x40] sm:$0xf]
        %v1482 = vld [vmem:[%s1235 + $0x44] sm:$0x1]
        %v1483 = vld [vmem:[%s1235 + $0x50] sm:$0xf]
        %v1484 = vld [vmem:[%s1235 + $0x54] sm:$0x1]
        %v1485 = vld [vmem:[%s1235 + $0x60] sm:$0xf]
        %v1486 = vld [vmem:[%s1235 + $0x64] sm:$0x1]
        %v1487 = vld [vmem:[%s1235 + $0x70] sm:$0xf]
        %v1488 = vld [vmem:[%s1235 + $0x74] sm:$0x1]
        %v1490 = vshrl.u32 %v1473, 16
        %v1492 = vrot.slane %v1490, 4
        %v1493 = vshll.u32 %v1473, 16
        %v1495 = vrot.slane %v1493, 5
        %v1496 = vor.u32 %v1492, %v1495
        %v1497 = vrot.slane %v1496, 4
        %v1499 = vshll.u32 %v1474, 16
        %v1501 = vrot.slane %v1499, 5
        %v1502 = vsel %vm552, %v1497, %v1501
        %v1504 = vshrl.u32 %v1475, 16
        %v1506 = vrot.slane %v1504, 4
        %v1507 = vshll.u32 %v1475, 16
        %v1509 = vrot.slane %v1507, 5
        %v1510 = vor.u32 %v1506, %v1509
        %v1511 = vrot.slane %v1510, 4
        %v1513 = vshll.u32 %v1476, 16
        %v1515 = vrot.slane %v1513, 5
        %v1516 = vsel %vm552, %v1511, %v1515
        %v1518 = vshrl.u32 %v1477, 16
        %v1520 = vrot.slane %v1518, 4
        %v1521 = vshll.u32 %v1477, 16
        %v1523 = vrot.slane %v1521, 5
        %v1524 = vor.u32 %v1520, %v1523
        %v1525 = vrot.slane %v1524, 4
        %v1527 = vshll.u32 %v1478, 16
        %v1529 = vrot.slane %v1527, 5
        %v1530 = vsel %vm552, %v1525, %v1529
        %v1532 = vshrl.u32 %v1479, 16
        %v1534 = vrot.slane %v1532, 4
        %v1535 = vshll.u32 %v1479, 16
        %v1537 = vrot.slane %v1535, 5
        %v1538 = vor.u32 %v1534, %v1537
        %v1539 = vrot.slane %v1538, 4
        %v1541 = vshll.u32 %v1480, 16
        %v1543 = vrot.slane %v1541, 5
        %v1544 = vsel %vm552, %v1539, %v1543
        %v1546 = vshrl.u32 %v1481, 16
        %v1548 = vrot.slane %v1546, 4
        %v1549 = vshll.u32 %v1481, 16
        %v1551 = vrot.slane %v1549, 5
        %v1552 = vor.u32 %v1548, %v1551
        %v1553 = vrot.slane %v1552, 4
        %v1555 = vshll.u32 %v1482, 16
        %v1557 = vrot.slane %v1555, 5
        %v1558 = vsel %vm552, %v1553, %v1557
        %v1560 = vshrl.u32 %v1483, 16
        %v1562 = vrot.slane %v1560, 4
        %v1563 = vshll.u32 %v1483, 16
        %v1565 = vrot.slane %v1563, 5
        %v1566 = vor.u32 %v1562, %v1565
        %v1567 = vrot.slane %v1566, 4
        %v1569 = vshll.u32 %v1484, 16
        %v1571 = vrot.slane %v1569, 5
        %v1572 = vsel %vm552, %v1567, %v1571
        %v1574 = vshrl.u32 %v1485, 16
        %v1576 = vrot.slane %v1574, 4
        %v1577 = vshll.u32 %v1485, 16
        %v1579 = vrot.slane %v1577, 5
        %v1580 = vor.u32 %v1576, %v1579
        %v1581 = vrot.slane %v1580, 4
        %v1583 = vshll.u32 %v1486, 16
        %v1585 = vrot.slane %v1583, 5
        %v1586 = vsel %vm552, %v1581, %v1585
        %v1588 = vshrl.u32 %v1487, 16
        %v1590 = vrot.slane %v1588, 4
        %v1591 = vshll.u32 %v1487, 16
        %v1593 = vrot.slane %v1591, 5
        %v1594 = vor.u32 %v1590, %v1593
        %v1595 = vrot.slane %v1594, 4
        %v1597 = vshll.u32 %v1488, 16
        %v1599 = vrot.slane %v1597, 5
        %v1600 = vsel %vm552, %v1595, %v1599
        %s1601 = scalar_lea.vmem [#allocation7], 16
        %v1602 = vld [vmem:[%s1601] sm:$0x3]
        %v1603 = vunpack.c.l.b16 %v1502
        %v1604 = vunpack.c.l.b16 %v1516
        %v1605 = vunpack.c.l.b16 %v1530
        %v1606 = vunpack.c.l.b16 %v1544
        %v1607 = vunpack.c.l.b16 %v1558
        %v1608 = vunpack.c.l.b16 %v1572
        %v1609 = vunpack.c.l.b16 %v1586
        %v1610 = vunpack.c.l.b16 %v1600
        %v1611 = vpack.c.b16 %v1604, %v1603
        %v1612 = vpack.c.b16 %v1606, %v1605
        %v1613 = vpack.c.b16 %v1608, %v1607
        %v1614 = vpack.c.b16 %v1610, %v1609
        %v1616 = vsel %vm352, %v1611, 0
        %v1619 = vsel %vm352, %v1612, 0
        %v1622 = vsel %vm352, %v1613, 0
        %v1625 = vsel %vm352, %v1614, 0
        %v1628 = vsel %vm365, %v1602, 0
        %1630 = vmatprep.subr.bf16.mxu0 0
        %1631 = vmatpush1.bf16.msra.mxu0 %v1628
        %1632 = vmatprep.subr.bf16.mxu0 0
        %1633 = vmatpush1.bf16.msra.mxu0 0
        %1634 = vmatprep.subr.bf16.mxu0 0
        %1635 = vmatpush1.bf16.msra.mxu0 0
        %1636 = vmatprep.subr.bf16.mxu0 0
        %1637 = vmatpush1.bf16.msra.mxu0 0
        %1638 = vmatprep.subr.bf16.mxu0 0
        %1639 = vmatpush1.bf16.msra.mxu0 0
        %1640 = vmatprep.subr.bf16.mxu0 0
        %1641 = vmatpush1.bf16.msra.mxu0 0
        %1642 = vmatprep.subr.bf16.mxu0 0
        %1643 = vmatpush1.bf16.msra.mxu0 0
        %1644 = vmatprep.subr.bf16.mxu0 0
        %1645 = vmatpush1.bf16.msra.mxu0 0
        %1646 = vmatprep.subr.bf16.mxu0 0
        %1647 = vmatpush1.bf16.msra.mxu0 0
        %1648 = vmatprep.subr.bf16.mxu0 0
        %1649 = vmatpush1.bf16.msra.mxu0 0
        %1650 = vmatprep.subr.bf16.mxu0 0
        %1651 = vmatpush1.bf16.msra.mxu0 0
        %1652 = vmatprep.subr.bf16.mxu0 0
        %1653 = vmatpush1.bf16.msra.mxu0 0
        %1654 = vmatprep.subr.bf16.mxu0 0
        %1655 = vmatpush1.bf16.msra.mxu0 0
        %1656 = vmatprep.subr.bf16.mxu0 0
        %1657 = vmatpush1.bf16.msra.mxu0 0
        %1658 = vmatprep.subr.bf16.mxu0 0
        %1659 = vmatpush1.bf16.msra.mxu0 0
        %1660 = vmatprep.subr.bf16.mxu0 0
        %1661 = vmatpush1.bf16.msra.mxu0 0
        %1662 = vmatprep.mubr.bf16.mxu0 0
        %1663 = vmatmul.mubr.bf16.gmra.mrb[0].mxu0 %v1616
        %v1664 = vpop.f32.mrb[0].mxu0
        %v1665 = vadd.f32 0.0, %v1664
        %v1666 = vpop.f32.mrb[0].mxu0
        %v1667 = vpop.f32.mrb[0].mxu0
        %v1668 = vadd.f32 0.0, %v1667
        %v1669 = vpop.f32.mrb[0].mxu0
        %1670 = vmatprep.mubr.bf16.mxu0 0
        %1671 = vmatmul.mubr.bf16.gmra.mrb[0].mxu0 %v1619
        %v1672 = vpop.f32.mrb[0].mxu0
        %v1673 = vadd.f32 0.0, %v1672
        %v1674 = vpop.f32.mrb[0].mxu0
        %v1675 = vpop.f32.mrb[0].mxu0
        %v1676 = vadd.f32 0.0, %v1675
        %v1677 = vpop.f32.mrb[0].mxu0
        %1678 = vmatprep.mubr.bf16.mxu0 0
        %1679 = vmatmul.mubr.bf16.gmra.mrb[0].mxu0 %v1622
        %v1680 = vpop.f32.mrb[0].mxu0
        %v1681 = vadd.f32 0.0, %v1680
        %v1682 = vpop.f32.mrb[0].mxu0
        %v1683 = vpop.f32.mrb[0].mxu0
        %v1684 = vadd.f32 0.0, %v1683
        %v1685 = vpop.f32.mrb[0].mxu0
        %1686 = vmatprep.mubr.bf16.mxu0 0
        %1687 = vmatmul.mubr.bf16.gmra.mrb[0].mxu0 %v1625
        %v1688 = vpop.f32.mrb[0].mxu0
        %v1689 = vadd.f32 0.0, %v1688
        %v1690 = vpop.f32.mrb[0].mxu0
        %v1691 = vpop.f32.mrb[0].mxu0
        %v1692 = vadd.f32 0.0, %v1691
        %v1693 = vpop.f32.mrb[0].mxu0
        %1694 = vdwg.mxu0
        %v1695 = vadd.f32 %v1465, %v1665
        %v1696 = vadd.f32 %v1466, %v1668
        %v1697 = vadd.f32 %v1467, %v1673
        %v1698 = vadd.f32 %v1468, %v1676
        %v1699 = vadd.f32 %v1469, %v1681
        %v1700 = vadd.f32 %v1470, %v1684
        %v1701 = vadd.f32 %v1471, %v1689
        %v1702 = vadd.f32 %v1472, %v1692
        %v1703 = vld [vmem:[#allocation8] sm:$0x1]
        %v1705 = vlaneseq
        %v1706 = vshrl.u32 %v1705, 7
        %v1707 = vsub.s32 0, %v1706
        %v1708 = vrot.slane %v1703, %v1707
        %v1710 = vadd.f32 %v1695, %v1708
        %v1711 = vadd.f32 %v1696, %v1708
        %v1712 = vadd.f32 %v1697, %v1708
        %v1713 = vadd.f32 %v1698, %v1708
        %v1714 = vadd.f32 %v1699, %v1708
        %v1715 = vadd.f32 %v1700, %v1708
        %v1716 = vadd.f32 %v1701, %v1708
        %v1717 = vadd.f32 %v1702, %v1708
        %1718 = vst [vmem:[%s310] sm:$0xff] %v1710
        %1719 = vst [vmem:[%s310 + $0x8] sm:$0xff] %v1711
        %1720 = vst [vmem:[%s310 + $0x10] sm:$0xff] %v1712
        %1721 = vst [vmem:[%s310 + $0x18] sm:$0xff] %v1713
        %1722 = vst [vmem:[%s310 + $0x20] sm:$0xff] %v1714
        %1723 = vst [vmem:[%s310 + $0x28] sm:$0xff] %v1715
        %1724 = vst [vmem:[%s310 + $0x30] sm:$0xff] %v1716
        %1725 = vst [vmem:[%s310 + $0x38] sm:$0xff] %v1717
        %s1726 = sand.u32 %s151, 1
        %s1727 = scalar_lea.sflag [#allocation4], %s1726
        %s1728 = sand.u32 %s151, 1
        %s1729 = smul.addr %s1728, 64
        %s1730 = scalar_lea.vmem [#allocation10], %s1729
        // Predicated region
        $region53: #{downsample.1} parent=35 // pred_check
          %p1731 = pneg %p161
        $region54: #{downsample.1} parent=35 // pred_check_branch
          %1733 = sbr.rel (%p1731) target = $region56
        $region55: #{downsample.1} parent=35 // pred_region
          %s1734 = smul.u32 8, %s29
          %s1736 = ssub.s32 1024, 1024
          %1737 = vsyncadd %s1727, %s1736
          %s1738 = sadd.s32 %s30, %s1734
          %s1739 = smul.addr %s1738, 128
          %s1740 = scalar_lea.hbm %s4, %s1739
          %s1741 = sshll.u32 %s1730, 4
          %s1742 = int_to_ptr.vmem [resolvable:$true] %s1741
          %1747 = dma.vmem_to_hbm [thread:$0]  %s1742, 1024, %s1740, %s1727, 128, 128, 8
        $region56: #{downsample.1} parent=35 // pred_fallthru
          _
      $region36: #{downsample.1} parent=5 // pred_fallthru
        _
      %p1748 = scmp.le.s32.totalorder 2, %s20
      // Predicated region
      $region57: #{downsample.1} parent=5 // pred_check
        %p1749 = pneg %p1748
      $region58: #{downsample.1} parent=5 // pred_check_branch
        %1751 = sbr.rel (%p1749) target = $region60
      $region59: #{downsample.1} parent=5 // pred_region
        %s1752 = ssub.s32 %s20, 2
        // Predicated region
        $region61: #{downsample.1} parent=59 // pred_check
          %p1753 = pneg %p167
        $region62: #{downsample.1} parent=59 // pred_check_branch
          %1755 = sbr.rel (%p1753) target = $region64
        $region63: #{downsample.1} parent=59 // pred_region
          %s1756 = sand.u32 %s152, 1
          %s1757 = scalar_lea.sflag [#allocation4], %s1756
          %s1758 = sand.u32 %s152, 1
          %s1759 = smul.addr %s1758, 64
          %s1760 = scalar_lea.vmem [#allocation10], %s1759
          %1761 = dma.done %s1757, 1024
        $region64: #{downsample.1} parent=59 // pred_fallthru
          _
      $region60: #{downsample.1} parent=5 // pred_fallthru
        _
    $region6: #{downsample.1} parent=1 // loop_footer
      %s24 = sadd.s32 1, %s20
    $region7: #{downsample.1} parent=1 // loop_footer_branch
      %19 = sbr.rel target = $region3
    $region8: #{downsample.1} parent=1 // loop_exit
      _
    %1762 = vsyncpa [#allocation3], 1
    %s1763 = scalar_lea.sflag [#allocation3], 1
    %1764 = vsyncpa %s1763, 1
    %1765 = vsyncpa [#allocation6], 1
    %s1766 = scalar_lea.sflag [#allocation6], 1
    %1767 = vsyncpa %s1766, 1
    %1768 = vsyncpa [#allocation9], 1
    %1769 = vsyncpa [#allocation4], 1
    %s1770 = scalar_lea.sflag [#allocation4], 1
    %1771 = vsyncpa %s1770, 1

</llo_original>
